<compile_context>
chip_gen: v7x
topology: tpu7x:2x2x1
jax: 0.10.0
libtpu: 0.0.40
codegen_flags: <defaults>
</compile_context>

<pallas_src>
import math

import numpy as np
import jax
import jax.numpy as jnp
from jax.experimental import pallas as pl
from jax.experimental.pallas import tpu as pltpu


# ---------------------------------------------------------------------------
# Parameter construction (deterministic, shapes implied by the module __init__)
# ---------------------------------------------------------------------------
def init_params(key, in_channels, K, n_trans, ccond, hidden):
    C = 4 * in_channels
    Ch = C // 2
    S = K + n_trans
    keys = jax.random.split(key, 6)

    # Haar mixing matrix: maps the per-channel [a, b, c, d] space-to-depth
    # layout to the PyTorch HaarDownsampling output channel ordering
    # (haar-component major), including the /4 normalisation.
    hmat = np.array([[1,  1,  1,  1],
                     [1, -1,  1, -1],
                     [1,  1, -1, -1],
                     [1, -1, -1,  1]], dtype=np.float32) / 4.0
    haar = np.zeros((C, C), dtype=np.float32)
    for c in range(in_channels):
        for h in range(4):
            for k in range(4):
                haar[c * 4 + k, h * in_channels + c] = hmat[h, k]

    # Invertible 1x1 conv weights: deterministic random rotations (Glow init).
    winit = jax.random.normal(keys[0], (S, C, C), jnp.float32)
    invconv_w = jnp.stack([jnp.linalg.qr(winit[s])[0] for s in range(S)])

    params = dict(
        haar=jnp.asarray(haar),
        actnorm_bias=0.1 * jax.random.normal(keys[1], (S, C), jnp.float32),
        actnorm_logs=0.1 * jax.random.normal(keys[2], (S, C), jnp.float32),
        invconv_w=invconv_w,
        # conditional affine coupling net (1x1 convs): concat(x1, cond) -> hidden -> (shift, scale)
        w1=0.05 * jax.random.normal(keys[3], (S, Ch + ccond, hidden), jnp.float32),
        b1=jnp.zeros((S, hidden), jnp.float32),
        w2=0.05 * jax.random.normal(keys[4], (S, hidden, C), jnp.float32),
        b2=jnp.zeros((S, C), jnp.float32),
        # Conv2dZeros prior (in_channels*2 -> in_channels*4): zero initialised.
        prior_w=jnp.zeros((Ch, C), jnp.float32),
        prior_b=jnp.zeros((1, C), jnp.float32),
        prior_logs=jnp.zeros((1, C), jnp.float32),
    )
    return params


def _pick_tile_n(npix, cap):
    """Largest legal pixel tile: full extent if small, else a multiple-of-128
    divisor of npix that fits the cap (falls back to a single full tile)."""
    if npix <= cap:
        return npix
    start = cap - (cap % 128)
    for t in range(start, 127, -128):
        if npix % t == 0:
            return t
    return npix  # always legal (full extent)


# ---------------------------------------------------------------------------
# Pallas implementation
# ---------------------------------------------------------------------------
def flow_block_forward(x, logdet, conditional, params, *, n_trans,
                       compute_dtype=jnp.float32, pixel_tile_cap=1024):
    B, Cin, H, W = x.shape
    Hs, Ws = H // 2, W // 2
    Npix = Hs * Ws
    C = 4 * Cin
    Ch = C // 2
    Ccond = conditional.shape[1]
    S = params["actnorm_bias"].shape[0]
    Hd = params["w1"].shape[-1]
    affine = [s >= n_trans for s in range(S)]        # static per-step flags
    cd = compute_dtype                               # matmul operand dtype
    wsize = jnp.dtype(cd).itemsize

    # ---- glue: space-to-depth, channels-on-sublanes / pixels-on-lanes ----
    # channel index = c*4 + (2*i + j), pixel index = hs*Ws + ws  (matches the
    # haar-matrix construction in init_params).
    xT = (x.reshape(B, Cin, Hs, 2, Ws, 2)
           .transpose(0, 1, 3, 5, 2, 4)
           .reshape(B, C, Npix)).astype(cd)
    condT = conditional.reshape(B, Ccond, Npix).astype(cd)

    # ---- one-time parameter fusion (JAX precompute, outside the kernel) ----
    # ActNorm fused into the 1x1-conv:  (X+b)*e(l) @ W = X @ (diag(e(l))W) + (b*e(l))W
    exp_al = jnp.exp(params["actnorm_logs"])                     # (S, C)
    Wp = exp_al[:, :, None] * params["invconv_w"]                # (S, C, C)
    bp = jnp.einsum("sc,scd->sd",
                    params["actnorm_bias"] * exp_al,
                    params["invconv_w"])                         # (S, C)
    # Haar mixing fused into step 0.
    fused_w = Wp.at[0].set(params["haar"] @ Wp[0])
    fused_wT = jnp.transpose(fused_w, (0, 2, 1)).astype(cd)      # (S, C, C)
    fused_bT = bp[:, :, None]                                    # (S, C, 1) f32

    # Coupling net: split w1 into x-half / cond-half (no in-kernel concat).
    w1xT = jnp.transpose(params["w1"][:, :Ch, :], (0, 2, 1)).astype(cd)   # (S, Hd, Ch)
    w1cT = jnp.transpose(params["w1"][:, Ch:, :], (0, 2, 1)).astype(cd)   # (S, Hd, Ccond)
    b1T = params["b1"][:, :, None]                               # (S, Hd, 1) f32
    w2T = jnp.transpose(params["w2"], (0, 2, 1)).astype(cd)      # (S, C, Hd)
    # Fold the "+2.0" pre-sigmoid offset of the scale half into b2.
    b2_fold = params["b2"] + jnp.concatenate(
        [jnp.zeros((Ch,), jnp.float32), jnp.full((Ch,), 2.0, jnp.float32)])[None, :]
    b2T = b2_fold[:, :, None]                                    # (S, C, 1) f32

    # Prior (Conv2dZeros): fold the exp(3*logs) output scale into the weights.
    prior_scale = jnp.exp(params["prior_logs"][0] * 3.0)         # (C,)
    prior_wT = (params["prior_w"] * prior_scale[None, :]).T.astype(cd)    # (C, Ch)
    prior_bT = (params["prior_b"][0] * prior_scale)[:, None]     # (C, 1) f32

    TILE_N = _pick_tile_n(Npix, pixel_tile_cap)
    NT = Npix // TILE_N

    # Explicit VMEM budget (portable to v7x's 64 MiB physical VMEM).
    tile_io_bytes = (wsize * TILE_N * (C + Ccond) + 4 * TILE_N * 2 * Ch) * 2
    weight_bytes = (wsize * (S * (C * C + Hd * (Ch + Ccond) + Hd * C) + C * Ch)
                    + 4 * (S * (C + Hd + C) + C))
    vmem_limit = int(min(max(4 * (tile_io_bytes + weight_bytes) + (8 << 20),
                             16 << 20), 48 << 20))

    def kernel(x_ref, c_ref, w_ref, b_ref, w1x_ref, w1c_ref, b1_ref,
               w2_ref, b2_ref, pw_ref, pb_ref,
               out_ref, z_ref, dld_ref, lp_ref,
               dld_acc, lp_acc):
        t = pl.program_id(1)

        @pl.when(t == 0)
        def _():
            dld_acc[...] = jnp.zeros_like(dld_acc)
            lp_acc[...] = jnp.zeros_like(lp_acc)

        X = x_ref[0]                       # (C, TILE_N)  pixels on lanes
        cnd = c_ref[0]                     # (Ccond, TILE_N), already compute dtype

        dlogdet = jnp.float32(0.0)
        for s in range(S):                 # static unroll over flow steps
            # fused (Haar for s==0) + ActNorm + invertible 1x1 conv
            X = jnp.dot(w_ref[s], X.astype(cd),
                        preferred_element_type=jnp.float32) + b_ref[s]
            if affine[s]:
                # conditional affine coupling (no concatenations)
                x1 = X[:Ch]
                x2 = X[Ch:]
                h = (jnp.dot(w1x_ref[s], x1.astype(cd),
                             preferred_element_type=jnp.float32)
                     + jnp.dot(w1c_ref[s], cnd,
                               preferred_element_type=jnp.float32)
                     + b1_ref[s])
                h = jnp.maximum(h, 0.0)
                h = jnp.dot(w2_ref[s], h.astype(cd),
                            preferred_element_type=jnp.float32) + b2_ref[s]
                shift = h[:Ch]
                raw = h[Ch:]               # "+2.0" already folded into b2
                # stable log(sigmoid(raw)); reused for scale and dlogdet
                log_scale = (jnp.minimum(raw, 0.0)
                             - jnp.log(1.0 + jnp.exp(-jnp.abs(raw))))
                x2 = (x2 + shift) * jnp.exp(log_scale)
                dlogdet = dlogdet + jnp.sum(log_scale)
                X = jnp.concatenate([x1, x2], axis=0)   # sublane-aligned

        # --- split + prior (Conv2dZeros, zero-init) + GaussianDiag.logp ---
        out = X[:Ch]
        z_new = X[Ch:]
        p = jnp.dot(pw_ref[...], out.astype(cd),
                    preferred_element_type=jnp.float32) + pb_ref[...]
        mean = p[:Ch]
        log_std = p[Ch:]
        # -0.5*log(2*pi)*Ch*Npix constant is added in the JAX epilogue.
        lp = -jnp.sum(log_std
                      + 0.5 * (z_new - mean) ** 2 * jnp.exp(-2.0 * log_std))

        out_ref[0] = out.astype(out_ref.dtype)
        z_ref[0] = z_new.astype(z_ref.dtype)
        dld_acc[...] = dld_acc[...] + dlogdet
        lp_acc[...] = lp_acc[...] + lp

        @pl.when(t == pl.num_programs(1) - 1)
        def _():
            dld_ref[...] = dld_acc[...].reshape(1, 1, 128)
            lp_ref[...] = lp_acc[...].reshape(1, 1, 128)

    def fullspec(shape):
        n = len(shape)
        return pl.BlockSpec(shape, lambda b, t, _n=n: (0,) * _n)

    in_specs = [
        pl.BlockSpec((1, C, TILE_N), lambda b, t: (b, 0, t)),        # x^T
        pl.BlockSpec((1, Ccond, TILE_N), lambda b, t: (b, 0, t)),    # cond^T
        fullspec((S, C, C)),            # fused invconv weights (transposed)
        fullspec((S, C, 1)),            # fused invconv bias
        fullspec((S, Hd, Ch)),          # coupling w1 (x half, transposed)
        fullspec((S, Hd, Ccond)),       # coupling w1 (cond half, transposed)
        fullspec((S, Hd, 1)),           # coupling b1
        fullspec((S, C, Hd)),           # coupling w2 (transposed)
        fullspec((S, C, 1)),            # coupling b2 (+2.0 folded)
        fullspec((C, Ch)),              # prior weight (scaled, transposed)
        fullspec((C, 1)),               # prior bias (scaled)
    ]
    out_specs = [
        pl.BlockSpec((1, Ch, TILE_N), lambda b, t: (b, 0, t)),
        pl.BlockSpec((1, Ch, TILE_N), lambda b, t: (b, 0, t)),
        pl.BlockSpec((1, 1, 128), lambda b, t: (b, 0, 0)),
        pl.BlockSpec((1, 1, 128), lambda b, t: (b, 0, 0)),
    ]
    out_shape = (
        jax.ShapeDtypeStruct((B, Ch, Npix), jnp.float32),
        jax.ShapeDtypeStruct((B, Ch, Npix), jnp.float32),
        jax.ShapeDtypeStruct((B, 1, 128), jnp.float32),
        jax.ShapeDtypeStruct((B, 1, 128), jnp.float32),
    )

    out_T, z_T, dld, lp = pl.pallas_call(
        kernel,
        out_shape=out_shape,
        grid_spec=pltpu.PrefetchScalarGridSpec(
            num_scalar_prefetch=0,
            grid=(B, NT),
            in_specs=in_specs,
            out_specs=out_specs,
            scratch_shapes=[pltpu.VMEM((1, 128), jnp.float32),
                            pltpu.VMEM((1, 128), jnp.float32)],
        ),
        compiler_params=pltpu.CompilerParams(
            dimension_semantics=("parallel", "arbitrary"),
            vmem_limit_bytes=vmem_limit,
        ),
    )(xT, condT, fused_wT, fused_bT, w1xT, w1cT, b1T, w2T, b2T,
      prior_wT, prior_bT)

    # ---- glue: constant log-det / log-p contributions + NCHW restore ----
    haar_jac = (Cin * H * W) / 4.0 * math.log(1.0 / 16.0)    # HaarDownsampling.jacobian
    actnorm_ld = Npix * jnp.sum(params["actnorm_logs"])
    # slogdet of the 1x1-conv weights has no in-kernel equivalent -> JAX glue.
    invconv_ld = Npix * jnp.sum(jnp.linalg.slogdet(params["invconv_w"])[1])
    logdet_out = logdet + haar_jac + actnorm_ld + invconv_ld + dld[:, 0, 0]
    log_p = lp[:, 0, 0] - 0.5 * math.log(2.0 * math.pi) * (Ch * Npix)

    out_nchw = out_T.reshape(B, Ch, Hs, Ws)       # already channel-major
    z_nchw = z_T.reshape(B, Ch, Hs, Ws)
    return out_nchw, logdet_out, log_p, z_nchw


# ---------------------------------------------------------------------------
# Pure-JAX reference (same math) for validation
# ---------------------------------------------------------------------------
def flow_block_reference(x, logdet, conditional, params, *, n_trans):
    B, Cin, H, W = x.shape
    Hs, Ws = H // 2, W // 2
    Npix = Hs * Ws
    C = 4 * Cin
    Ch = C // 2
    Ccond = conditional.shape[1]
    S = params["actnorm_bias"].shape[0]

    xs = x.reshape(B, Cin, Hs, 2, Ws, 2).transpose(0, 2, 4, 1, 3, 5).reshape(B, Npix, C)
    cond = conditional.transpose(0, 2, 3, 1).reshape(B, Npix, Ccond)

    X = jnp.einsum("bnc,cd->bnd", xs, params["haar"])
    dld = jnp.zeros((B,), jnp.float32)
    for s in range(S):
        X = (X + params["actnorm_bias"][s]) * jnp.exp(params["actnorm_logs"][s])
        X = jnp.einsum("bnc,cd->bnd", X, params["invconv_w"][s])
        if s >= n_trans:
            x1, x2 = X[..., :Ch], X[..., Ch:]
            h = jnp.einsum("bnc,cd->bnd", jnp.concatenate([x1, cond], -1),
                           params["w1"][s]) + params["b1"][s]
            h = jnp.maximum(h, 0.0)
            h = jnp.einsum("bnc,cd->bnd", h, params["w2"][s]) + params["b2"][s]
            shift = h[..., :Ch]
            scale = jax.nn.sigmoid(h[..., Ch:] + 2.0)
            x2 = (x2 + shift) * scale
            dld = dld + jnp.sum(jnp.log(scale), axis=(1, 2))
            X = jnp.concatenate([x1, x2], axis=-1)

    out, z_new = X[..., :Ch], X[..., Ch:]
    p = (jnp.einsum("bnc,cd->bnd", out, params["prior_w"])
         + params["prior_b"][0]) * jnp.exp(params["prior_logs"][0] * 3.0)
    mean, log_std = p[..., :Ch], p[..., Ch:]
    log_p = jnp.sum(-0.5 * (jnp.log(2 * jnp.pi) + 2 * log_std
                            + (z_new - mean) ** 2 * jnp.exp(-2 * log_std)),
                    axis=(1, 2))

    haar_jac = (Cin * H * W) / 4.0 * math.log(1.0 / 16.0)
    logdet_out = (logdet + haar_jac
                  + Npix * jnp.sum(params["actnorm_logs"])
                  + Npix * jnp.sum(jnp.linalg.slogdet(params["invconv_w"])[1])
                  + dld)
    out_nchw = out.reshape(B, Hs, Ws, Ch).transpose(0, 3, 1, 2)
    z_nchw = z_new.reshape(B, Hs, Ws, Ch).transpose(0, 3, 1, 2)
    return out_nchw, logdet_out, log_p, z_nchw


if __name__ == "__main__":
    key = jax.random.PRNGKey(0)
    B, Cin, H, W = 2, 4, 16, 16
    K, n_trans, Ccond, hidden = 2, 1, 8, 32

    k1, k2, k3 = jax.random.split(key, 3)
    x = jax.random.normal(k1, (B, Cin, H, W), jnp.float32)
    conditional = jax.random.normal(k2, (B, Ccond, H // 2, W // 2), jnp.float32)
    logdet = jnp.zeros((B,), jnp.float32)
    params = init_params(k3, Cin, K, n_trans, Ccond, hidden)

    # compute_dtype=jnp.bfloat16 is available for v6e/v7x MXU feeding (and
    # halves weight/activation DMA); kept at f32 here so the validation
    # against the f32 reference is tight.
    out, logdet_out, log_p, z_new = flow_block_forward(
        x, logdet, conditional, params, n_trans=n_trans,
        compute_dtype=jnp.float32)
    jax.block_until_ready((out, logdet_out, log_p, z_new))

    r_out, r_ld, r_lp, r_z = flow_block_reference(
        x, logdet, conditional, params, n_trans=n_trans)
    np.testing.assert_allclose(np.asarray(out), np.asarray(r_out), rtol=2e-2, atol=2e-2)
    np.testing.assert_allclose(np.asarray(z_new), np.asarray(r_z), rtol=2e-2, atol=2e-2)
    np.testing.assert_allclose(np.asarray(logdet_out), np.asarray(r_ld), rtol=2e-2, atol=2e-2)
    np.testing.assert_allclose(np.asarray(log_p), np.asarray(r_lp), rtol=2e-2, atol=2e-2)

    print("KERNEL_OK")
</pallas_src>

<mosaic_0001>
module attributes {stable_mosaic.version = 11 : i64} {
  func.func @kernel(%arg0: i32, %arg1: i32, %arg2: memref<1x16x64xf32, #tpu.memory_space<vmem>>, %arg3: memref<1x8x64xf32, #tpu.memory_space<vmem>>, %arg4: memref<3x16x16xf32, #tpu.memory_space<vmem>>, %arg5: memref<3x16x1xf32, #tpu.memory_space<vmem>>, %arg6: memref<3x32x8xf32, #tpu.memory_space<vmem>>, %arg7: memref<3x32x8xf32, #tpu.memory_space<vmem>>, %arg8: memref<3x32x1xf32, #tpu.memory_space<vmem>>, %arg9: memref<3x16x32xf32, #tpu.memory_space<vmem>>, %arg10: memref<3x16x1xf32, #tpu.memory_space<vmem>>, %arg11: memref<16x8xf32, #tpu.memory_space<vmem>>, %arg12: memref<16x1xf32, #tpu.memory_space<vmem>>, %arg13: memref<1x8x64xf32, #tpu.memory_space<vmem>>, %arg14: memref<1x8x64xf32, #tpu.memory_space<vmem>>, %arg15: memref<1x1x128xf32, #tpu.memory_space<vmem>>, %arg16: memref<1x1x128xf32, #tpu.memory_space<vmem>>, %arg17: memref<1x128xf32, #tpu.memory_space<vmem>>, %arg18: memref<1x128xf32, #tpu.memory_space<vmem>>) attributes {dimension_semantics = [#tpu.dimension_semantics<parallel>, #tpu.dimension_semantics<arbitrary>], iteration_bounds = array<i64: 2, 1>, scalar_prefetch = 0 : i64, scratch_operands = 2 : i64, tpu.core_type = #tpu.core_type<tc>, window_params = [{transform_indices = @transform_0, window_bounds = array<i64: 1, 16, 64>}, {transform_indices = @transform_1, window_bounds = array<i64: 1, 8, 64>}, {pipeline_mode = #tpu.pipeline_mode<synchronous>, transform_indices = @transform_2, window_bounds = array<i64: 3, 16, 16>}, {pipeline_mode = #tpu.pipeline_mode<synchronous>, transform_indices = @transform_3, window_bounds = array<i64: 3, 16, 1>}, {pipeline_mode = #tpu.pipeline_mode<synchronous>, transform_indices = @transform_4, window_bounds = array<i64: 3, 32, 8>}, {pipeline_mode = #tpu.pipeline_mode<synchronous>, transform_indices = @transform_5, window_bounds = array<i64: 3, 32, 8>}, {pipeline_mode = #tpu.pipeline_mode<synchronous>, transform_indices = @transform_6, window_bounds = array<i64: 3, 32, 1>}, {pipeline_mode = #tpu.pipeline_mode<synchronous>, transform_indices = @transform_7, window_bounds = array<i64: 3, 16, 32>}, {pipeline_mode = #tpu.pipeline_mode<synchronous>, transform_indices = @transform_8, window_bounds = array<i64: 3, 16, 1>}, {pipeline_mode = #tpu.pipeline_mode<synchronous>, transform_indices = @transform_9, window_bounds = array<i64: 16, 8>}, {pipeline_mode = #tpu.pipeline_mode<synchronous>, transform_indices = @transform_10, window_bounds = array<i64: 16, 1>}, {transform_indices = @transform_11, window_bounds = array<i64: 1, 8, 64>}, {transform_indices = @transform_12, window_bounds = array<i64: 1, 8, 64>}, {transform_indices = @transform_13, window_bounds = array<i64: 1, 1, 128>}, {transform_indices = @transform_14, window_bounds = array<i64: 1, 1, 128>}]} {
    %c0_i32 = arith.constant 0 : i32
    %0 = arith.cmpi eq, %arg1, %c0_i32 : i32
    %1 = arith.extui %0 : i1 to i32
    %c0_i32_0 = arith.constant 0 : i32
    %2 = arith.cmpi ne, %1, %c0_i32_0 : i32
    scf.if %2 {
      %cst_96 = arith.constant 0.000000e+00 : f32
      %154 = vector.broadcast %cst_96 : f32 to vector<1x128xf32>
      %c0_97 = arith.constant 0 : index
      %c0_98 = arith.constant 0 : index
      %155 = vector.load %arg17[%c0_97, %c0_98] : memref<1x128xf32, #tpu.memory_space<vmem>>, vector<1x128xf32>
      tpu.vector_store %arg17[%c0_97, %c0_98], %154 {strides = array<i32>} : memref<1x128xf32, #tpu.memory_space<vmem>>, vector<1x128xf32>,
      %cst_99 = arith.constant 0.000000e+00 : f32
      %156 = vector.broadcast %cst_99 : f32 to vector<1x128xf32>
      %c0_100 = arith.constant 0 : index
      %c0_101 = arith.constant 0 : index
      %157 = vector.load %arg18[%c0_100, %c0_101] : memref<1x128xf32, #tpu.memory_space<vmem>>, vector<1x128xf32>
      tpu.vector_store %arg18[%c0_100, %c0_101], %156 {strides = array<i32>} : memref<1x128xf32, #tpu.memory_space<vmem>>, vector<1x128xf32>,
    } else {
    }
    %c0 = arith.constant 0 : index
    %c0_1 = arith.constant 0 : index
    %c0_2 = arith.constant 0 : index
    %3 = vector.load %arg2[%c0, %c0_1, %c0_2] : memref<1x16x64xf32, #tpu.memory_space<vmem>>, vector<1x16x64xf32>
    %4 = vector.shape_cast %3 : vector<1x16x64xf32> to vector<16x64xf32>
    %c0_3 = arith.constant 0 : index
    %c0_4 = arith.constant 0 : index
    %c0_5 = arith.constant 0 : index
    %5 = vector.load %arg3[%c0_3, %c0_4, %c0_5] : memref<1x8x64xf32, #tpu.memory_space<vmem>>, vector<1x8x64xf32>
    %6 = vector.shape_cast %5 : vector<1x8x64xf32> to vector<8x64xf32>
    %c0_6 = arith.constant 0 : index
    %c0_7 = arith.constant 0 : index
    %c0_8 = arith.constant 0 : index
    %7 = vector.load %arg4[%c0_6, %c0_7, %c0_8] : memref<3x16x16xf32, #tpu.memory_space<vmem>>, vector<1x16x16xf32>
    %8 = vector.shape_cast %7 : vector<1x16x16xf32> to vector<16x16xf32>
    %cst = arith.constant dense<0.000000e+00> : vector<16x64xf32>
    %9 = tpu.matmul %8, %4, %cst {dimension_numbers = #tpu.dot_dimension_numbers<[1], [0], [0], [1], [0, 0, 1, 1], [], []>} : vector<16x16xf32>, vector<16x64xf32>, vector<16x64xf32> -> vector<16x64xf32>
    %c0_9 = arith.constant 0 : index
    %c0_10 = arith.constant 0 : index
    %c0_11 = arith.constant 0 : index
    %10 = vector.load %arg5[%c0_9, %c0_10, %c0_11] : memref<3x16x1xf32, #tpu.memory_space<vmem>>, vector<1x16x1xf32>
    %11 = vector.shape_cast %10 : vector<1x16x1xf32> to vector<16x1xf32>
    %12 = vector.broadcast %11 : vector<16x1xf32> to vector<16x64xf32>
    %13 = arith.addf %9, %12 : vector<16x64xf32>
    %c1 = arith.constant 1 : index
    %c0_12 = arith.constant 0 : index
    %c0_13 = arith.constant 0 : index
    %14 = vector.load %arg4[%c1, %c0_12, %c0_13] : memref<3x16x16xf32, #tpu.memory_space<vmem>>, vector<1x16x16xf32>
    %15 = vector.shape_cast %14 : vector<1x16x16xf32> to vector<16x16xf32>
    %cst_14 = arith.constant dense<0.000000e+00> : vector<16x64xf32>
    %16 = tpu.matmul %15, %13, %cst_14 {dimension_numbers = #tpu.dot_dimension_numbers<[1], [0], [0], [1], [0, 0, 1, 1], [], []>} : vector<16x16xf32>, vector<16x64xf32>, vector<16x64xf32> -> vector<16x64xf32>
    %c1_15 = arith.constant 1 : index
    %c0_16 = arith.constant 0 : index
    %c0_17 = arith.constant 0 : index
    %17 = vector.load %arg5[%c1_15, %c0_16, %c0_17] : memref<3x16x1xf32, #tpu.memory_space<vmem>>, vector<1x16x1xf32>
    %18 = vector.shape_cast %17 : vector<1x16x1xf32> to vector<16x1xf32>
    %19 = vector.broadcast %18 : vector<16x1xf32> to vector<16x64xf32>
    %20 = arith.addf %16, %19 : vector<16x64xf32>
    %21 = vector.extract_strided_slice %20 {offsets = [0, 0], sizes = [8, 64], strides = [1, 1]} : vector<16x64xf32> to vector<8x64xf32>
    %22 = vector.extract_strided_slice %20 {offsets = [8, 0], sizes = [8, 64], strides = [1, 1]} : vector<16x64xf32> to vector<8x64xf32>
    %c1_18 = arith.constant 1 : index
    %c0_19 = arith.constant 0 : index
    %c0_20 = arith.constant 0 : index
    %23 = vector.load %arg6[%c1_18, %c0_19, %c0_20] : memref<3x32x8xf32, #tpu.memory_space<vmem>>, vector<1x32x8xf32>
    %24 = vector.shape_cast %23 : vector<1x32x8xf32> to vector<32x8xf32>
    %cst_21 = arith.constant dense<0.000000e+00> : vector<32x64xf32>
    %25 = tpu.matmul %24, %21, %cst_21 {dimension_numbers = #tpu.dot_dimension_numbers<[1], [0], [0], [1], [0, 0, 1, 1], [], []>} : vector<32x8xf32>, vector<8x64xf32>, vector<32x64xf32> -> vector<32x64xf32>
    %c1_22 = arith.constant 1 : index
    %c0_23 = arith.constant 0 : index
    %c0_24 = arith.constant 0 : index
    %26 = vector.load %arg7[%c1_22, %c0_23, %c0_24] : memref<3x32x8xf32, #tpu.memory_space<vmem>>, vector<1x32x8xf32>
    %27 = vector.shape_cast %26 : vector<1x32x8xf32> to vector<32x8xf32>
    %cst_25 = arith.constant dense<0.000000e+00> : vector<32x64xf32>
    %28 = tpu.matmul %27, %6, %cst_25 {dimension_numbers = #tpu.dot_dimension_numbers<[1], [0], [0], [1], [0, 0, 1, 1], [], []>} : vector<32x8xf32>, vector<8x64xf32>, vector<32x64xf32> -> vector<32x64xf32>
    %29 = arith.addf %25, %28 : vector<32x64xf32>
    %c1_26 = arith.constant 1 : index
    %c0_27 = arith.constant 0 : index
    %c0_28 = arith.constant 0 : index
    %30 = vector.load %arg8[%c1_26, %c0_27, %c0_28] : memref<3x32x1xf32, #tpu.memory_space<vmem>>, vector<1x32x1xf32>
    %31 = vector.shape_cast %30 : vector<1x32x1xf32> to vector<32x1xf32>
    %32 = vector.broadcast %31 : vector<32x1xf32> to vector<32x64xf32>
    %33 = arith.addf %29, %32 : vector<32x64xf32>
    %cst_29 = arith.constant 0.000000e+00 : f32
    %34 = vector.broadcast %cst_29 : f32 to vector<32x64xf32>
    %35 = arith.maximumf %33, %34 : vector<32x64xf32>
    %c1_30 = arith.constant 1 : index
    %c0_31 = arith.constant 0 : index
    %c0_32 = arith.constant 0 : index
    %36 = vector.load %arg9[%c1_30, %c0_31, %c0_32] : memref<3x16x32xf32, #tpu.memory_space<vmem>>, vector<1x16x32xf32>
    %37 = vector.shape_cast %36 : vector<1x16x32xf32> to vector<16x32xf32>
    %cst_33 = arith.constant dense<0.000000e+00> : vector<16x64xf32>
    %38 = tpu.matmul %37, %35, %cst_33 {dimension_numbers = #tpu.dot_dimension_numbers<[1], [0], [0], [1], [0, 0, 1, 1], [], []>} : vector<16x32xf32>, vector<32x64xf32>, vector<16x64xf32> -> vector<16x64xf32>
    %c1_34 = arith.constant 1 : index
    %c0_35 = arith.constant 0 : index
    %c0_36 = arith.constant 0 : index
    %39 = vector.load %arg10[%c1_34, %c0_35, %c0_36] : memref<3x16x1xf32, #tpu.memory_space<vmem>>, vector<1x16x1xf32>
    %40 = vector.shape_cast %39 : vector<1x16x1xf32> to vector<16x1xf32>
    %41 = vector.broadcast %40 : vector<16x1xf32> to vector<16x64xf32>
    %42 = arith.addf %38, %41 : vector<16x64xf32>
    %43 = vector.extract_strided_slice %42 {offsets = [0, 0], sizes = [8, 64], strides = [1, 1]} : vector<16x64xf32> to vector<8x64xf32>
    %44 = vector.extract_strided_slice %42 {offsets = [8, 0], sizes = [8, 64], strides = [1, 1]} : vector<16x64xf32> to vector<8x64xf32>
    %cst_37 = arith.constant 0.000000e+00 : f32
    %45 = vector.broadcast %cst_37 : f32 to vector<8x64xf32>
    %46 = arith.minimumf %44, %45 : vector<8x64xf32>
    %47 = math.absf %44 : vector<8x64xf32>
    %cst_38 = arith.constant 0.000000e+00 : f32
    %48 = vector.broadcast %cst_38 : f32 to vector<8x64xf32>
    %49 = arith.subf %48, %47 : vector<8x64xf32>
    %50 = math.exp %49 : vector<8x64xf32>
    %cst_39 = arith.constant 1.000000e+00 : f32
    %51 = vector.broadcast %cst_39 : f32 to vector<8x64xf32>
    %52 = arith.addf %51, %50 : vector<8x64xf32>
    %53 = math.log %52 : vector<8x64xf32>
    %54 = arith.subf %46, %53 : vector<8x64xf32>
    %55 = arith.addf %22, %43 : vector<8x64xf32>
    %56 = math.exp %54 : vector<8x64xf32>
    %57 = arith.mulf %55, %56 : vector<8x64xf32>
    %58 = vector.shape_cast %54 : vector<8x64xf32> to vector<1x8x64xf32>
    %cst_40 = arith.constant dense<0.000000e+00> : vector<1xf32>
    %59 = vector.multi_reduction <add>, %58, %cst_40 [1, 2] : vector<1x8x64xf32> to vector<1xf32>
    %60 = vector.shape_cast %59 : vector<1xf32> to vector<1x1x1xf32>
    %61 = vector.extract %60[0, 0, 0] : f32 from vector<1x1x1xf32>
    %cst_41 = arith.constant 0.000000e+00 : f32
    %62 = arith.addf %cst_41, %61 : f32
    %63 = tpu.concatenate %21, %57 in 0 : vector<8x64xf32>, vector<8x64xf32> -> vector<16x64xf32>
    %c2 = arith.constant 2 : index
    %c0_42 = arith.constant 0 : index
    %c0_43 = arith.constant 0 : index
    %64 = vector.load %arg4[%c2, %c0_42, %c0_43] : memref<3x16x16xf32, #tpu.memory_space<vmem>>, vector<1x16x16xf32>
    %65 = vector.shape_cast %64 : vector<1x16x16xf32> to vector<16x16xf32>
    %cst_44 = arith.constant dense<0.000000e+00> : vector<16x64xf32>
    %66 = tpu.matmul %65, %63, %cst_44 {dimension_numbers = #tpu.dot_dimension_numbers<[1], [0], [0], [1], [0, 0, 1, 1], [], []>} : vector<16x16xf32>, vector<16x64xf32>, vector<16x64xf32> -> vector<16x64xf32>
    %c2_45 = arith.constant 2 : index
    %c0_46 = arith.constant 0 : index
    %c0_47 = arith.constant 0 : index
    %67 = vector.load %arg5[%c2_45, %c0_46, %c0_47] : memref<3x16x1xf32, #tpu.memory_space<vmem>>, vector<1x16x1xf32>
    %68 = vector.shape_cast %67 : vector<1x16x1xf32> to vector<16x1xf32>
    %69 = vector.broadcast %68 : vector<16x1xf32> to vector<16x64xf32>
    %70 = arith.addf %66, %69 : vector<16x64xf32>
    %71 = vector.extract_strided_slice %70 {offsets = [0, 0], sizes = [8, 64], strides = [1, 1]} : vector<16x64xf32> to vector<8x64xf32>
    %72 = vector.extract_strided_slice %70 {offsets = [8, 0], sizes = [8, 64], strides = [1, 1]} : vector<16x64xf32> to vector<8x64xf32>
    %c2_48 = arith.constant 2 : index
    %c0_49 = arith.constant 0 : index
    %c0_50 = arith.constant 0 : index
    %73 = vector.load %arg6[%c2_48, %c0_49, %c0_50] : memref<3x32x8xf32, #tpu.memory_space<vmem>>, vector<1x32x8xf32>
    %74 = vector.shape_cast %73 : vector<1x32x8xf32> to vector<32x8xf32>
    %cst_51 = arith.constant dense<0.000000e+00> : vector<32x64xf32>
    %75 = tpu.matmul %74, %71, %cst_51 {dimension_numbers = #tpu.dot_dimension_numbers<[1], [0], [0], [1], [0, 0, 1, 1], [], []>} : vector<32x8xf32>, vector<8x64xf32>, vector<32x64xf32> -> vector<32x64xf32>
    %c2_52 = arith.constant 2 : index
    %c0_53 = arith.constant 0 : index
    %c0_54 = arith.constant 0 : index
    %76 = vector.load %arg7[%c2_52, %c0_53, %c0_54] : memref<3x32x8xf32, #tpu.memory_space<vmem>>, vector<1x32x8xf32>
    %77 = vector.shape_cast %76 : vector<1x32x8xf32> to vector<32x8xf32>
    %cst_55 = arith.constant dense<0.000000e+00> : vector<32x64xf32>
    %78 = tpu.matmul %77, %6, %cst_55 {dimension_numbers = #tpu.dot_dimension_numbers<[1], [0], [0], [1], [0, 0, 1, 1], [], []>} : vector<32x8xf32>, vector<8x64xf32>, vector<32x64xf32> -> vector<32x64xf32>
    %79 = arith.addf %75, %78 : vector<32x64xf32>
    %c2_56 = arith.constant 2 : index
    %c0_57 = arith.constant 0 : index
    %c0_58 = arith.constant 0 : index
    %80 = vector.load %arg8[%c2_56, %c0_57, %c0_58] : memref<3x32x1xf32, #tpu.memory_space<vmem>>, vector<1x32x1xf32>
    %81 = vector.shape_cast %80 : vector<1x32x1xf32> to vector<32x1xf32>
    %82 = vector.broadcast %81 : vector<32x1xf32> to vector<32x64xf32>
    %83 = arith.addf %79, %82 : vector<32x64xf32>
    %cst_59 = arith.constant 0.000000e+00 : f32
    %84 = vector.broadcast %cst_59 : f32 to vector<32x64xf32>
    %85 = arith.maximumf %83, %84 : vector<32x64xf32>
    %c2_60 = arith.constant 2 : index
    %c0_61 = arith.constant 0 : index
    %c0_62 = arith.constant 0 : index
    %86 = vector.load %arg9[%c2_60, %c0_61, %c0_62] : memref<3x16x32xf32, #tpu.memory_space<vmem>>, vector<1x16x32xf32>
    %87 = vector.shape_cast %86 : vector<1x16x32xf32> to vector<16x32xf32>
    %cst_63 = arith.constant dense<0.000000e+00> : vector<16x64xf32>
    %88 = tpu.matmul %87, %85, %cst_63 {dimension_numbers = #tpu.dot_dimension_numbers<[1], [0], [0], [1], [0, 0, 1, 1], [], []>} : vector<16x32xf32>, vector<32x64xf32>, vector<16x64xf32> -> vector<16x64xf32>
    %c2_64 = arith.constant 2 : index
    %c0_65 = arith.constant 0 : index
    %c0_66 = arith.constant 0 : index
    %89 = vector.load %arg10[%c2_64, %c0_65, %c0_66] : memref<3x16x1xf32, #tpu.memory_space<vmem>>, vector<1x16x1xf32>
    %90 = vector.shape_cast %89 : vector<1x16x1xf32> to vector<16x1xf32>
    %91 = vector.broadcast %90 : vector<16x1xf32> to vector<16x64xf32>
    %92 = arith.addf %88, %91 : vector<16x64xf32>
    %93 = vector.extract_strided_slice %92 {offsets = [0, 0], sizes = [8, 64], strides = [1, 1]} : vector<16x64xf32> to vector<8x64xf32>
    %94 = vector.extract_strided_slice %92 {offsets = [8, 0], sizes = [8, 64], strides = [1, 1]} : vector<16x64xf32> to vector<8x64xf32>
    %cst_67 = arith.constant 0.000000e+00 : f32
    %95 = vector.broadcast %cst_67 : f32 to vector<8x64xf32>
    %96 = arith.minimumf %94, %95 : vector<8x64xf32>
    %97 = math.absf %94 : vector<8x64xf32>
    %cst_68 = arith.constant 0.000000e+00 : f32
    %98 = vector.broadcast %cst_68 : f32 to vector<8x64xf32>
    %99 = arith.subf %98, %97 : vector<8x64xf32>
    %100 = math.exp %99 : vector<8x64xf32>
    %cst_69 = arith.constant 1.000000e+00 : f32
    %101 = vector.broadcast %cst_69 : f32 to vector<8x64xf32>
    %102 = arith.addf %101, %100 : vector<8x64xf32>
    %103 = math.log %102 : vector<8x64xf32>
    %104 = arith.subf %96, %103 : vector<8x64xf32>
    %105 = arith.addf %72, %93 : vector<8x64xf32>
    %106 = math.exp %104 : vector<8x64xf32>
    %107 = arith.mulf %105, %106 : vector<8x64xf32>
    %108 = vector.shape_cast %104 : vector<8x64xf32> to vector<1x8x64xf32>
    %cst_70 = arith.constant dense<0.000000e+00> : vector<1xf32>
    %109 = vector.multi_reduction <add>, %108, %cst_70 [1, 2] : vector<1x8x64xf32> to vector<1xf32>
    %110 = vector.shape_cast %109 : vector<1xf32> to vector<1x1x1xf32>
    %111 = vector.extract %110[0, 0, 0] : f32 from vector<1x1x1xf32>
    %112 = arith.addf %62, %111 : f32
    %113 = tpu.concatenate %71, %107 in 0 : vector<8x64xf32>, vector<8x64xf32> -> vector<16x64xf32>
    %114 = vector.extract_strided_slice %113 {offsets = [0, 0], sizes = [8, 64], strides = [1, 1]} : vector<16x64xf32> to vector<8x64xf32>
    %115 = vector.extract_strided_slice %113 {offsets = [8, 0], sizes = [8, 64], strides = [1, 1]} : vector<16x64xf32> to vector<8x64xf32>
    %c0_71 = arith.constant 0 : index
    %c0_72 = arith.constant 0 : index
    %116 = vector.load %arg11[%c0_71, %c0_72] : memref<16x8xf32, #tpu.memory_space<vmem>>, vector<16x8xf32>
    %cst_73 = arith.constant dense<0.000000e+00> : vector<16x64xf32>
    %117 = tpu.matmul %116, %114, %cst_73 {dimension_numbers = #tpu.dot_dimension_numbers<[1], [0], [0], [1], [0, 0, 1, 1], [], []>} : vector<16x8xf32>, vector<8x64xf32>, vector<16x64xf32> -> vector<16x64xf32>
    %c0_74 = arith.constant 0 : index
    %c0_75 = arith.constant 0 : index
    %118 = vector.load %arg12[%c0_74, %c0_75] : memref<16x1xf32, #tpu.memory_space<vmem>>, vector<16x1xf32>
    %119 = vector.broadcast %118 : vector<16x1xf32> to vector<16x64xf32>
    %120 = arith.addf %117, %119 : vector<16x64xf32>
    %121 = vector.extract_strided_slice %120 {offsets = [0, 0], sizes = [8, 64], strides = [1, 1]} : vector<16x64xf32> to vector<8x64xf32>
    %122 = vector.extract_strided_slice %120 {offsets = [8, 0], sizes = [8, 64], strides = [1, 1]} : vector<16x64xf32> to vector<8x64xf32>
    %123 = arith.subf %115, %121 : vector<8x64xf32>
    %124 = arith.mulf %123, %123 : vector<8x64xf32>
    %cst_76 = arith.constant 5.000000e-01 : f32
    %125 = vector.broadcast %cst_76 : f32 to vector<8x64xf32>
    %126 = arith.mulf %125, %124 : vector<8x64xf32>
    %cst_77 = arith.constant -2.000000e+00 : f32
    %127 = vector.broadcast %cst_77 : f32 to vector<8x64xf32>
    %128 = arith.mulf %127, %122 : vector<8x64xf32>
    %129 = math.exp %128 : vector<8x64xf32>
    %130 = arith.mulf %126, %129 : vector<8x64xf32>
    %131 = arith.addf %122, %130 : vector<8x64xf32>
    %132 = vector.shape_cast %131 : vector<8x64xf32> to vector<1x8x64xf32>
    %cst_78 = arith.constant dense<0.000000e+00> : vector<1xf32>
    %133 = vector.multi_reduction <add>, %132, %cst_78 [1, 2] : vector<1x8x64xf32> to vector<1xf32>
    %134 = vector.shape_cast %133 : vector<1xf32> to vector<1x1x1xf32>
    %135 = vector.extract %134[0, 0, 0] : f32 from vector<1x1x1xf32>
    %cst_79 = arith.constant 0.000000e+00 : f32
    %136 = arith.subf %cst_79, %135 : f32
    %c0_80 = arith.constant 0 : index
    %c0_81 = arith.constant 0 : index
    %c0_82 = arith.constant 0 : index
    %137 = vector.load %arg13[%c0_80, %c0_81, %c0_82] : memref<1x8x64xf32, #tpu.memory_space<vmem>>, vector<1x8x64xf32>
    %138 = vector.shape_cast %137 : vector<1x8x64xf32> to vector<8x64xf32>
    %139 = vector.shape_cast %114 : vector<8x64xf32> to vector<1x8x64xf32>
    tpu.vector_store %arg13[%c0_80, %c0_81, %c0_82], %139 {strides = array<i32>} : memref<1x8x64xf32, #tpu.memory_space<vmem>>, vector<1x8x64xf32>,
    %c0_83 = arith.constant 0 : index
    %c0_84 = arith.constant 0 : index
    %c0_85 = arith.constant 0 : index
    %140 = vector.load %arg14[%c0_83, %c0_84, %c0_85] : memref<1x8x64xf32, #tpu.memory_space<vmem>>, vector<1x8x64xf32>
    %141 = vector.shape_cast %140 : vector<1x8x64xf32> to vector<8x64xf32>
    %142 = vector.shape_cast %115 : vector<8x64xf32> to vector<1x8x64xf32>
    tpu.vector_store %arg14[%c0_83, %c0_84, %c0_85], %142 {strides = array<i32>} : memref<1x8x64xf32, #tpu.memory_space<vmem>>, vector<1x8x64xf32>,
    %c0_86 = arith.constant 0 : index
    %c0_87 = arith.constant 0 : index
    %143 = vector.load %arg17[%c0_86, %c0_87] : memref<1x128xf32, #tpu.memory_space<vmem>>, vector<1x128xf32>
    %144 = vector.broadcast %112 : f32 to vector<1x128xf32>
    %145 = arith.addf %143, %144 : vector<1x128xf32>
    %c0_88 = arith.constant 0 : index
    %c0_89 = arith.constant 0 : index
    %146 = vector.load %arg17[%c0_88, %c0_89] : memref<1x128xf32, #tpu.memory_space<vmem>>, vector<1x128xf32>
    tpu.vector_store %arg17[%c0_88, %c0_89], %145 {strides = array<i32>} : memref<1x128xf32, #tpu.memory_space<vmem>>, vector<1x128xf32>,
    %c0_90 = arith.constant 0 : index
    %c0_91 = arith.constant 0 : index
    %147 = vector.load %arg18[%c0_90, %c0_91] : memref<1x128xf32, #tpu.memory_space<vmem>>, vector<1x128xf32>
    %148 = vector.broadcast %136 : f32 to vector<1x128xf32>
    %149 = arith.addf %147, %148 : vector<1x128xf32>
    %c0_92 = arith.constant 0 : index
    %c0_93 = arith.constant 0 : index
    %150 = vector.load %arg18[%c0_92, %c0_93] : memref<1x128xf32, #tpu.memory_space<vmem>>, vector<1x128xf32>
    tpu.vector_store %arg18[%c0_92, %c0_93], %149 {strides = array<i32>} : memref<1x128xf32, #tpu.memory_space<vmem>>, vector<1x128xf32>,
    %c0_i32_94 = arith.constant 0 : i32
    %151 = arith.cmpi eq, %arg1, %c0_i32_94 : i32
    %152 = arith.extui %151 : i1 to i32
    %c0_i32_95 = arith.constant 0 : i32
    %153 = arith.cmpi ne, %152, %c0_i32_95 : i32
    scf.if %153 {
      %c0_96 = arith.constant 0 : index
      %c0_97 = arith.constant 0 : index
      %154 = vector.load %arg17[%c0_96, %c0_97] : memref<1x128xf32, #tpu.memory_space<vmem>>, vector<1x128xf32>
      %155 = vector.shape_cast %154 : vector<1x128xf32> to vector<1x1x128xf32>
      %c0_98 = arith.constant 0 : index
      %c0_99 = arith.constant 0 : index
      %c0_100 = arith.constant 0 : index
      %156 = vector.load %arg15[%c0_98, %c0_99, %c0_100] : memref<1x1x128xf32, #tpu.memory_space<vmem>>, vector<1x1x128xf32>
      tpu.vector_store %arg15[%c0_98, %c0_99, %c0_100], %155 {strides = array<i32>} : memref<1x1x128xf32, #tpu.memory_space<vmem>>, vector<1x1x128xf32>,
      %c0_101 = arith.constant 0 : index
      %c0_102 = arith.constant 0 : index
      %157 = vector.load %arg18[%c0_101, %c0_102] : memref<1x128xf32, #tpu.memory_space<vmem>>, vector<1x128xf32>
      %158 = vector.shape_cast %157 : vector<1x128xf32> to vector<1x1x128xf32>
      %c0_103 = arith.constant 0 : index
      %c0_104 = arith.constant 0 : index
      %c0_105 = arith.constant 0 : index
      %159 = vector.load %arg16[%c0_103, %c0_104, %c0_105] : memref<1x1x128xf32, #tpu.memory_space<vmem>>, vector<1x1x128xf32>
      tpu.vector_store %arg16[%c0_103, %c0_104, %c0_105], %158 {strides = array<i32>} : memref<1x1x128xf32, #tpu.memory_space<vmem>>, vector<1x1x128xf32>,
    } else {
    }
    return
  }
  func.func @transform_0(%arg0: i32, %arg1: i32) -> (i32, i32, i32) {
    %c0_i32 = arith.constant 0 : i32
    %c0_i32_0 = arith.constant 0 : i32
    return %arg0, %c0_i32, %arg1 : i32, i32, i32
  }
  func.func @transform_1(%arg0: i32, %arg1: i32) -> (i32, i32, i32) {
    %c0_i32 = arith.constant 0 : i32
    %c0_i32_0 = arith.constant 0 : i32
    return %arg0, %c0_i32, %arg1 : i32, i32, i32
  }
  func.func @transform_2(%arg0: i32, %arg1: i32) -> (i32, i32, i32) {
    %c0_i32 = arith.constant 0 : i32
    %c0_i32_0 = arith.constant 0 : i32
    %c0_i32_1 = arith.constant 0 : i32
    %c0_i32_2 = arith.constant 0 : i32
    return %c0_i32, %c0_i32_0, %c0_i32_1 : i32, i32, i32
  }
  func.func @transform_3(%arg0: i32, %arg1: i32) -> (i32, i32, i32) {
    %c0_i32 = arith.constant 0 : i32
    %c0_i32_0 = arith.constant 0 : i32
    %c0_i32_1 = arith.constant 0 : i32
    %c0_i32_2 = arith.constant 0 : i32
    return %c0_i32, %c0_i32_0, %c0_i32_1 : i32, i32, i32
  }
  func.func @transform_4(%arg0: i32, %arg1: i32) -> (i32, i32, i32) {
    %c0_i32 = arith.constant 0 : i32
    %c0_i32_0 = arith.constant 0 : i32
    %c0_i32_1 = arith.constant 0 : i32
    %c0_i32_2 = arith.constant 0 : i32
    return %c0_i32, %c0_i32_0, %c0_i32_1 : i32, i32, i32
  }
  func.func @transform_5(%arg0: i32, %arg1: i32) -> (i32, i32, i32) {
    %c0_i32 = arith.constant 0 : i32
    %c0_i32_0 = arith.constant 0 : i32
    %c0_i32_1 = arith.constant 0 : i32
    %c0_i32_2 = arith.constant 0 : i32
    return %c0_i32, %c0_i32_0, %c0_i32_1 : i32, i32, i32
  }
  func.func @transform_6(%arg0: i32, %arg1: i32) -> (i32, i32, i32) {
    %c0_i32 = arith.constant 0 : i32
    %c0_i32_0 = arith.constant 0 : i32
    %c0_i32_1 = arith.constant 0 : i32
    %c0_i32_2 = arith.constant 0 : i32
    return %c0_i32, %c0_i32_0, %c0_i32_1 : i32, i32, i32
  }
  func.func @transform_7(%arg0: i32, %arg1: i32) -> (i32, i32, i32) {
    %c0_i32 = arith.constant 0 : i32
    %c0_i32_0 = arith.constant 0 : i32
    %c0_i32_1 = arith.constant 0 : i32
    %c0_i32_2 = arith.constant 0 : i32
    return %c0_i32, %c0_i32_0, %c0_i32_1 : i32, i32, i32
  }
  func.func @transform_8(%arg0: i32, %arg1: i32) -> (i32, i32, i32) {
    %c0_i32 = arith.constant 0 : i32
    %c0_i32_0 = arith.constant 0 : i32
    %c0_i32_1 = arith.constant 0 : i32
    %c0_i32_2 = arith.constant 0 : i32
    return %c0_i32, %c0_i32_0, %c0_i32_1 : i32, i32, i32
  }
  func.func @transform_9(%arg0: i32, %arg1: i32) -> (i32, i32) {
    %c0_i32 = arith.constant 0 : i32
    %c0_i32_0 = arith.constant 0 : i32
    %c0_i32_1 = arith.constant 0 : i32
    return %c0_i32, %c0_i32_0 : i32, i32
  }
  func.func @transform_10(%arg0: i32, %arg1: i32) -> (i32, i32) {
    %c0_i32 = arith.constant 0 : i32
    %c0_i32_0 = arith.constant 0 : i32
    %c0_i32_1 = arith.constant 0 : i32
    return %c0_i32, %c0_i32_0 : i32, i32
  }
  func.func @transform_11(%arg0: i32, %arg1: i32) -> (i32, i32, i32) {
    %c0_i32 = arith.constant 0 : i32
    %c0_i32_0 = arith.constant 0 : i32
    return %arg0, %c0_i32, %arg1 : i32, i32, i32
  }
  func.func @transform_12(%arg0: i32, %arg1: i32) -> (i32, i32, i32) {
    %c0_i32 = arith.constant 0 : i32
    %c0_i32_0 = arith.constant 0 : i32
    return %arg0, %c0_i32, %arg1 : i32, i32, i32
  }
  func.func @transform_13(%arg0: i32, %arg1: i32) -> (i32, i32, i32) {
    %c0_i32 = arith.constant 0 : i32
    %c0_i32_0 = arith.constant 0 : i32
    %c0_i32_1 = arith.constant 0 : i32
    return %arg0, %c0_i32, %c0_i32_0 : i32, i32, i32
  }
  func.func @transform_14(%arg0: i32, %arg1: i32) -> (i32, i32, i32) {
    %c0_i32 = arith.constant 0 : i32
    %c0_i32_0 = arith.constant 0 : i32
    %c0_i32_1 = arith.constant 0 : i32
    return %arg0, %c0_i32, %c0_i32_0 : i32, i32, i32
  }
}

</mosaic_0001>

<llo_original>
// kernel: tpu_custom_call.1
$region0: #{tpu_custom_call.1}
  #allocation0 [shape = 'u32[]', space=smem, size = 0x4, offset = 0x4, fixed_abs, tag = 'smem constant byte address 0x4 - core index']
  #allocation1 [shape = 'u32[144,128]{1,0:T(1,128)}', space=vmem, size = 0x12000, scoped, tag = 'internal scratch']
  #allocation2 [shape = 'f32[1,128]{1,0:T(1,128)}', space=vmem, size = 0x200, scoped, tag = 'scratch operand']
  #allocation3 [shape = 'f32[1,128]{1,0:T(1,128)}', space=vmem, size = 0x200, scoped, tag = 'scratch operand']
  %s0 = inlined_call_operand.vmem [shape: f32[2,16,64], index: 0, kind: input, shape index: {}]
  %s1 = inlined_call_operand.vmem [shape: f32[2,8,64], index: 1, kind: input, shape index: {}]
  %s2 = inlined_call_operand.vmem [shape: f32[3,16,16], index: 2, kind: input, shape index: {}]
  %s3 = inlined_call_operand.vmem [shape: f32[3,16,1], index: 3, kind: input, shape index: {}]
  %s4 = inlined_call_operand.vmem [shape: f32[3,32,8], index: 4, kind: input, shape index: {}]
  %s5 = inlined_call_operand.vmem [shape: f32[3,32,8], index: 5, kind: input, shape index: {}]
  %s6 = inlined_call_operand.vmem [shape: f32[3,32,1], index: 6, kind: input, shape index: {}]
  %s7 = inlined_call_operand.vmem [shape: f32[3,16,32], index: 7, kind: input, shape index: {}]
  %s8 = inlined_call_operand.vmem [shape: f32[3,16,1], index: 8, kind: input, shape index: {}]
  %s9 = inlined_call_operand.vmem [shape: f32[16,8], index: 9, kind: input, shape index: {}]
  %s10 = inlined_call_operand.vmem [shape: f32[16,1], index: 10, kind: input, shape index: {}]
  %s11 = inlined_call_operand.hbm [shape: f32[2,8,64], index: 11, kind: output, shape index: {0}]
  %s12 = inlined_call_operand.hbm [shape: f32[2,8,64], index: 12, kind: output, shape index: {1}]
  %s13 = inlined_call_operand.hbm [shape: f32[2,1,128], index: 13, kind: output, shape index: {2}]
  %s14 = inlined_call_operand.hbm [shape: f32[2,1,128], index: 14, kind: output, shape index: {3}]
  %15 = xla_tuple %s11, %s12, %s13, %s14
  %s16 = sld [smem:[#allocation0]]
  $region109: #{tpu_custom_call.1} parent=0
    _
  %s18 = ssub.s32 1, %s16
  %s19 = scalar_select 0, %s18, %s16
  $region1: #{tpu_custom_call.1} parent=0
    #allocation4 [shape = 'u8[8192]{0}', space=vmem, size = 0x2000, scoped, tag = 'output window, operand 0']
    #allocation5 [shape = 's32[2]{0}', space=sflag, size = 0x8, scoped, tag = 'scoped memory for tpu_custom_call.1']
    #allocation6 [shape = 'u8[8192]{0}', space=vmem, size = 0x2000, scoped, tag = 'output window, operand 1']
    #allocation7 [shape = 's32[2]{0}', space=sflag, size = 0x8, scoped, tag = 'scoped memory for tpu_custom_call.1']
    #allocation8 [shape = 'u8[1024]{0}', space=vmem, size = 0x400, scoped, tag = 'output window, operand 2']
    #allocation9 [shape = 'u8[1024]{0}', space=vmem, size = 0x400, scoped, tag = 'output window, operand 3']
    #allocation10 [shape = 's32[2]{0}', space=sflag, size = 0x8, scoped, tag = 'scoped memory for tpu_custom_call.1']
    %20 = vsyncpa [#allocation5], 0
    %s21 = scalar_lea.sflag [#allocation5], 1
    %22 = vsyncpa %s21, 0
    %23 = vsyncpa [#allocation7], 0
    %s24 = scalar_lea.sflag [#allocation7], 1
    %25 = vsyncpa %s24, 0
    %26 = vsyncpa [#allocation10], 0
    %s27 = scalar_lea.sflag [#allocation10], 1
    %28 = vsyncpa %s27, 0
    loop: start=0, step=1, limit=4
    $region2: #{tpu_custom_call.1} parent=1 // loop_pre_header
      _
    $region3: #{tpu_custom_call.1} parent=1 // loop_header
      %s30 = sphi 0, %s34
      %p31 = scmp.ge.s32.totalorder %s30, 4
      %s37 = sphi 0, %s49
      %s38 = sphi 0, %s45
      %s39 = sphi 0, %s37
      %s40 = sphi 0, %s38
      %s41 = sphi 0, %s39
      %s42 = sphi 0, %s40
      %s54 = sphi 0, %s56
      %s57 = sphi 0, %s54
      %s58 = sphi 0, %s57
      %s74 = sphi 0, %s58
      %s82 = sphi 0, %s84
      %s85 = sphi 0, %s82
      %s86 = sphi 0, %s85
      %s102 = sphi 0, %s86
      %s106 = sphi 0, %s106
      %s108 = sphi 0, %s106
      %s109 = sphi 0, %s108
      %s123 = sphi 0, %s109
      %s127 = sphi 0, %s127
      %s129 = sphi 0, %s127
      %s130 = sphi 0, %s129
      %s144 = sphi 0, %s130
      %s148 = sphi 0, %s148
      %s150 = sphi 0, %s148
      %s151 = sphi 0, %s150
      %s165 = sphi 0, %s151
      %s169 = sphi 0, %s169
      %s171 = sphi 0, %s169
      %s172 = sphi 0, %s171
      %s186 = sphi 0, %s172
      %s190 = sphi 0, %s190
      %s192 = sphi 0, %s190
      %s193 = sphi 0, %s192
      %s207 = sphi 0, %s193
      %s211 = sphi 0, %s211
      %s213 = sphi 0, %s211
      %s214 = sphi 0, %s213
      %s228 = sphi 0, %s214
      %s232 = sphi 0, %s232
      %s234 = sphi 0, %s232
      %s235 = sphi 0, %s234
      %s249 = sphi 0, %s235
      %s253 = sphi 0, %s253
      %s255 = sphi 0, %s253
      %s256 = sphi 0, %s255
      %s270 = sphi 0, %s256
      %s274 = sphi 0, %s274
      %s276 = sphi 0, %s274
      %s277 = sphi 0, %s276
      %s291 = sphi 0, %s277
      %s299 = sphi 0, %s301
      %s302 = sphi 0, %s299
      %s303 = sphi 0, %s302
      %s319 = sphi 0, %s303
      %s327 = sphi 0, %s329
      %s330 = sphi 0, %s327
      %s331 = sphi 0, %s330
      %s347 = sphi 0, %s331
      %s353 = sphi 0, %s355
      %s356 = sphi 0, %s353
      %s357 = sphi 0, %s356
      %s373 = sphi 0, %s357
      %s379 = sphi 0, %s381
      %s382 = sphi 0, %s379
      %s383 = sphi 0, %s382
      %s399 = sphi 0, %s383
    $region4: #{tpu_custom_call.1} parent=1 // loop_header_branch
      %33 = sbr.rel (%p31) target = $region8
    $region5: #{tpu_custom_call.1} parent=1 // loop_body
      %s35 = ssub.s32 %s30, 1
      %s36 = ssub.s32 %s30, 2
      %s43 = sadd.s32 1, %s38
      %p44 = scmp.ge.s32.totalorder %s43, 1
      %s45 = scalar_select %p44, 0, %s43
      %s46 = sadd.s32 1, %s37
      %s47 = scalar_select %p44, %s46, %s37
      %p48 = scmp.ge.s32.totalorder %s47, 2
      %s49 = scalar_select %p48, 0, %s47
      %s50 = ssub.s32 %s37, %s49
      %s51 = ssub.s32 %s38, %s45
      %s52 = sor.u32 %s50, %s51
      %p53 = scmp.eq.s32.totalorder %s52, 0
      %s55 = sadd.s32 %s54, 1
      %s56 = scalar_select %p53, %s54, %s55
      %p59 = pneg %p53
      %p60 = scmp.eq.s32.totalorder %s30, 1
      %p61 = por %p59, %p60
      %p62 = scmp.ne.s32.totalorder %s54, %s57
      %p63 = scmp.eq.s32.totalorder %s30, 0
      %p64 = por %p62, %p63
      %p65 = scmp.ne.s32.totalorder %s54, %s57
      %p66 = scmp.eq.s32.totalorder %s35, 1
      %p67 = por %p65, %p66
      %p68 = scmp.ne.s32.totalorder %s57, %s58
      %p69 = scmp.eq.s32.totalorder %s35, 0
      %p70 = por %p68, %p69
      %p71 = scmp.ne.s32.totalorder %s57, %s58
      %p72 = scmp.eq.s32.totalorder %s36, 1
      %p73 = por %p71, %p72
      %p75 = scmp.ne.s32.totalorder %s58, %s74
      %p76 = scmp.eq.s32.totalorder %s36, 0
      %p77 = por %p75, %p76
      %s78 = ssub.s32 %s37, %s49
      %s79 = ssub.s32 %s38, %s45
      %s80 = sor.u32 %s78, %s79
      %p81 = scmp.eq.s32.totalorder %s80, 0
      %s83 = sadd.s32 %s82, 1
      %s84 = scalar_select %p81, %s82, %s83
      %p87 = pneg %p81
      %p88 = scmp.eq.s32.totalorder %s30, 1
      %p89 = por %p87, %p88
      %p90 = scmp.ne.s32.totalorder %s82, %s85
      %p91 = scmp.eq.s32.totalorder %s30, 0
      %p92 = por %p90, %p91
      %p93 = scmp.ne.s32.totalorder %s82, %s85
      %p94 = scmp.eq.s32.totalorder %s35, 1
      %p95 = por %p93, %p94
      %p96 = scmp.ne.s32.totalorder %s85, %s86
      %p97 = scmp.eq.s32.totalorder %s35, 0
      %p98 = por %p96, %p97
      %p99 = scmp.ne.s32.totalorder %s85, %s86
      %p100 = scmp.eq.s32.totalorder %s36, 1
      %p101 = por %p99, %p100
      %p103 = scmp.ne.s32.totalorder %s86, %s102
      %p104 = scmp.eq.s32.totalorder %s36, 0
      %p105 = por %p103, %p104
      %s107 = sadd.s32 %s106, 1
      %p110 = scmp.eq.s32.totalorder %s30, 1
      %p111 = scmp.ne.s32.totalorder %s106, %s108
      %p112 = scmp.eq.s32.totalorder %s30, 0
      %p113 = por %p111, %p112
      %p114 = scmp.ne.s32.totalorder %s106, %s108
      %p115 = scmp.eq.s32.totalorder %s35, 1
      %p116 = por %p114, %p115
      %p117 = scmp.ne.s32.totalorder %s108, %s109
      %p118 = scmp.eq.s32.totalorder %s35, 0
      %p119 = por %p117, %p118
      %p120 = scmp.ne.s32.totalorder %s108, %s109
      %p121 = scmp.eq.s32.totalorder %s36, 1
      %p122 = por %p120, %p121
      %p124 = scmp.ne.s32.totalorder %s109, %s123
      %p125 = scmp.eq.s32.totalorder %s36, 0
      %p126 = por %p124, %p125
      %s128 = sadd.s32 %s127, 1
      %p131 = scmp.eq.s32.totalorder %s30, 1
      %p132 = scmp.ne.s32.totalorder %s127, %s129
      %p133 = scmp.eq.s32.totalorder %s30, 0
      %p134 = por %p132, %p133
      %p135 = scmp.ne.s32.totalorder %s127, %s129
      %p136 = scmp.eq.s32.totalorder %s35, 1
      %p137 = por %p135, %p136
      %p138 = scmp.ne.s32.totalorder %s129, %s130
      %p139 = scmp.eq.s32.totalorder %s35, 0
      %p140 = por %p138, %p139
      %p141 = scmp.ne.s32.totalorder %s129, %s130
      %p142 = scmp.eq.s32.totalorder %s36, 1
      %p143 = por %p141, %p142
      %p145 = scmp.ne.s32.totalorder %s130, %s144
      %p146 = scmp.eq.s32.totalorder %s36, 0
      %p147 = por %p145, %p146
      %s149 = sadd.s32 %s148, 1
      %p152 = scmp.eq.s32.totalorder %s30, 1
      %p153 = scmp.ne.s32.totalorder %s148, %s150
      %p154 = scmp.eq.s32.totalorder %s30, 0
      %p155 = por %p153, %p154
      %p156 = scmp.ne.s32.totalorder %s148, %s150
      %p157 = scmp.eq.s32.totalorder %s35, 1
      %p158 = por %p156, %p157
      %p159 = scmp.ne.s32.totalorder %s150, %s151
      %p160 = scmp.eq.s32.totalorder %s35, 0
      %p161 = por %p159, %p160
      %p162 = scmp.ne.s32.totalorder %s150, %s151
      %p163 = scmp.eq.s32.totalorder %s36, 1
      %p164 = por %p162, %p163
      %p166 = scmp.ne.s32.totalorder %s151, %s165
      %p167 = scmp.eq.s32.totalorder %s36, 0
      %p168 = por %p166, %p167
      %s170 = sadd.s32 %s169, 1
      %p173 = scmp.eq.s32.totalorder %s30, 1
      %p174 = scmp.ne.s32.totalorder %s169, %s171
      %p175 = scmp.eq.s32.totalorder %s30, 0
      %p176 = por %p174, %p175
      %p177 = scmp.ne.s32.totalorder %s169, %s171
      %p178 = scmp.eq.s32.totalorder %s35, 1
      %p179 = por %p177, %p178
      %p180 = scmp.ne.s32.totalorder %s171, %s172
      %p181 = scmp.eq.s32.totalorder %s35, 0
      %p182 = por %p180, %p181
      %p183 = scmp.ne.s32.totalorder %s171, %s172
      %p184 = scmp.eq.s32.totalorder %s36, 1
      %p185 = por %p183, %p184
      %p187 = scmp.ne.s32.totalorder %s172, %s186
      %p188 = scmp.eq.s32.totalorder %s36, 0
      %p189 = por %p187, %p188
      %s191 = sadd.s32 %s190, 1
      %p194 = scmp.eq.s32.totalorder %s30, 1
      %p195 = scmp.ne.s32.totalorder %s190, %s192
      %p196 = scmp.eq.s32.totalorder %s30, 0
      %p197 = por %p195, %p196
      %p198 = scmp.ne.s32.totalorder %s190, %s192
      %p199 = scmp.eq.s32.totalorder %s35, 1
      %p200 = por %p198, %p199
      %p201 = scmp.ne.s32.totalorder %s192, %s193
      %p202 = scmp.eq.s32.totalorder %s35, 0
      %p203 = por %p201, %p202
      %p204 = scmp.ne.s32.totalorder %s192, %s193
      %p205 = scmp.eq.s32.totalorder %s36, 1
      %p206 = por %p204, %p205
      %p208 = scmp.ne.s32.totalorder %s193, %s207
      %p209 = scmp.eq.s32.totalorder %s36, 0
      %p210 = por %p208, %p209
      %s212 = sadd.s32 %s211, 1
      %p215 = scmp.eq.s32.totalorder %s30, 1
      %p216 = scmp.ne.s32.totalorder %s211, %s213
      %p217 = scmp.eq.s32.totalorder %s30, 0
      %p218 = por %p216, %p217
      %p219 = scmp.ne.s32.totalorder %s211, %s213
      %p220 = scmp.eq.s32.totalorder %s35, 1
      %p221 = por %p219, %p220
      %p222 = scmp.ne.s32.totalorder %s213, %s214
      %p223 = scmp.eq.s32.totalorder %s35, 0
      %p224 = por %p222, %p223
      %p225 = scmp.ne.s32.totalorder %s213, %s214
      %p226 = scmp.eq.s32.totalorder %s36, 1
      %p227 = por %p225, %p226
      %p229 = scmp.ne.s32.totalorder %s214, %s228
      %p230 = scmp.eq.s32.totalorder %s36, 0
      %p231 = por %p229, %p230
      %s233 = sadd.s32 %s232, 1
      %p236 = scmp.eq.s32.totalorder %s30, 1
      %p237 = scmp.ne.s32.totalorder %s232, %s234
      %p238 = scmp.eq.s32.totalorder %s30, 0
      %p239 = por %p237, %p238
      %p240 = scmp.ne.s32.totalorder %s232, %s234
      %p241 = scmp.eq.s32.totalorder %s35, 1
      %p242 = por %p240, %p241
      %p243 = scmp.ne.s32.totalorder %s234, %s235
      %p244 = scmp.eq.s32.totalorder %s35, 0
      %p245 = por %p243, %p244
      %p246 = scmp.ne.s32.totalorder %s234, %s235
      %p247 = scmp.eq.s32.totalorder %s36, 1
      %p248 = por %p246, %p247
      %p250 = scmp.ne.s32.totalorder %s235, %s249
      %p251 = scmp.eq.s32.totalorder %s36, 0
      %p252 = por %p250, %p251
      %s254 = sadd.s32 %s253, 1
      %p257 = scmp.eq.s32.totalorder %s30, 1
      %p258 = scmp.ne.s32.totalorder %s253, %s255
      %p259 = scmp.eq.s32.totalorder %s30, 0
      %p260 = por %p258, %p259
      %p261 = scmp.ne.s32.totalorder %s253, %s255
      %p262 = scmp.eq.s32.totalorder %s35, 1
      %p263 = por %p261, %p262
      %p264 = scmp.ne.s32.totalorder %s255, %s256
      %p265 = scmp.eq.s32.totalorder %s35, 0
      %p266 = por %p264, %p265
      %p267 = scmp.ne.s32.totalorder %s255, %s256
      %p268 = scmp.eq.s32.totalorder %s36, 1
      %p269 = por %p267, %p268
      %p271 = scmp.ne.s32.totalorder %s256, %s270
      %p272 = scmp.eq.s32.totalorder %s36, 0
      %p273 = por %p271, %p272
      %s275 = sadd.s32 %s274, 1
      %p278 = scmp.eq.s32.totalorder %s30, 1
      %p279 = scmp.ne.s32.totalorder %s274, %s276
      %p280 = scmp.eq.s32.totalorder %s30, 0
      %p281 = por %p279, %p280
      %p282 = scmp.ne.s32.totalorder %s274, %s276
      %p283 = scmp.eq.s32.totalorder %s35, 1
      %p284 = por %p282, %p283
      %p285 = scmp.ne.s32.totalorder %s276, %s277
      %p286 = scmp.eq.s32.totalorder %s35, 0
      %p287 = por %p285, %p286
      %p288 = scmp.ne.s32.totalorder %s276, %s277
      %p289 = scmp.eq.s32.totalorder %s36, 1
      %p290 = por %p288, %p289
      %p292 = scmp.ne.s32.totalorder %s277, %s291
      %p293 = scmp.eq.s32.totalorder %s36, 0
      %p294 = por %p292, %p293
      %s295 = ssub.s32 %s37, %s49
      %s296 = ssub.s32 %s38, %s45
      %s297 = sor.u32 %s295, %s296
      %p298 = scmp.eq.s32.totalorder %s297, 0
      %s300 = sadd.s32 %s299, 1
      %s301 = scalar_select %p298, %s299, %s300
      %p304 = pneg %p298
      %p305 = scmp.eq.s32.totalorder %s30, 1
      %p306 = por %p304, %p305
      %p307 = scmp.ne.s32.totalorder %s299, %s302
      %p308 = scmp.eq.s32.totalorder %s30, 0
      %p309 = por %p307, %p308
      %p310 = scmp.ne.s32.totalorder %s299, %s302
      %p311 = scmp.eq.s32.totalorder %s35, 1
      %p312 = por %p310, %p311
      %p313 = scmp.ne.s32.totalorder %s302, %s303
      %p314 = scmp.eq.s32.totalorder %s35, 0
      %p315 = por %p313, %p314
      %p316 = scmp.ne.s32.totalorder %s302, %s303
      %p317 = scmp.eq.s32.totalorder %s36, 1
      %p318 = por %p316, %p317
      %p320 = scmp.ne.s32.totalorder %s303, %s319
      %p321 = scmp.eq.s32.totalorder %s36, 0
      %p322 = por %p320, %p321
      %s323 = ssub.s32 %s37, %s49
      %s324 = ssub.s32 %s38, %s45
      %s325 = sor.u32 %s323, %s324
      %p326 = scmp.eq.s32.totalorder %s325, 0
      %s328 = sadd.s32 %s327, 1
      %s329 = scalar_select %p326, %s327, %s328
      %p332 = pneg %p326
      %p333 = scmp.eq.s32.totalorder %s30, 1
      %p334 = por %p332, %p333
      %p335 = scmp.ne.s32.totalorder %s327, %s330
      %p336 = scmp.eq.s32.totalorder %s30, 0
      %p337 = por %p335, %p336
      %p338 = scmp.ne.s32.totalorder %s327, %s330
      %p339 = scmp.eq.s32.totalorder %s35, 1
      %p340 = por %p338, %p339
      %p341 = scmp.ne.s32.totalorder %s330, %s331
      %p342 = scmp.eq.s32.totalorder %s35, 0
      %p343 = por %p341, %p342
      %p344 = scmp.ne.s32.totalorder %s330, %s331
      %p345 = scmp.eq.s32.totalorder %s36, 1
      %p346 = por %p344, %p345
      %p348 = scmp.ne.s32.totalorder %s331, %s347
      %p349 = scmp.eq.s32.totalorder %s36, 0
      %p350 = por %p348, %p349
      %s351 = ssub.s32 %s37, %s49
      %p352 = scmp.eq.s32.totalorder %s351, 0
      %s354 = sadd.s32 %s353, 1
      %s355 = scalar_select %p352, %s353, %s354
      %p358 = pneg %p352
      %p359 = scmp.eq.s32.totalorder %s30, 1
      %p360 = por %p358, %p359
      %p361 = scmp.ne.s32.totalorder %s353, %s356
      %p362 = scmp.eq.s32.totalorder %s30, 0
      %p363 = por %p361, %p362
      %p364 = scmp.ne.s32.totalorder %s353, %s356
      %p365 = scmp.eq.s32.totalorder %s35, 1
      %p366 = por %p364, %p365
      %p367 = scmp.ne.s32.totalorder %s356, %s357
      %p368 = scmp.eq.s32.totalorder %s35, 0
      %p369 = por %p367, %p368
      %p370 = scmp.ne.s32.totalorder %s356, %s357
      %p371 = scmp.eq.s32.totalorder %s36, 1
      %p372 = por %p370, %p371
      %p374 = scmp.ne.s32.totalorder %s357, %s373
      %p375 = scmp.eq.s32.totalorder %s36, 0
      %p376 = por %p374, %p375
      %s377 = ssub.s32 %s37, %s49
      %p378 = scmp.eq.s32.totalorder %s377, 0
      %s380 = sadd.s32 %s379, 1
      %s381 = scalar_select %p378, %s379, %s380
      %p384 = pneg %p378
      %p385 = scmp.eq.s32.totalorder %s30, 1
      %p386 = por %p384, %p385
      %p387 = scmp.ne.s32.totalorder %s379, %s382
      %p388 = scmp.eq.s32.totalorder %s30, 0
      %p389 = por %p387, %p388
      %p390 = scmp.ne.s32.totalorder %s379, %s382
      %p391 = scmp.eq.s32.totalorder %s35, 1
      %p392 = por %p390, %p391
      %p393 = scmp.ne.s32.totalorder %s382, %s383
      %p394 = scmp.eq.s32.totalorder %s35, 0
      %p395 = por %p393, %p394
      %p396 = scmp.ne.s32.totalorder %s382, %s383
      %p397 = scmp.eq.s32.totalorder %s36, 1
      %p398 = por %p396, %p397
      %p400 = scmp.ne.s32.totalorder %s383, %s399
      %p401 = scmp.eq.s32.totalorder %s36, 0
      %p402 = por %p400, %p401
      %p403 = scmp.le.s32.totalorder 1, %s30
      %p404 = scmp.lt.s32.totalorder %s30, 3
      %p405 = pnand %p403, %p404
      %p406 = pneg %p405
      // Predicated region
      $region9: #{tpu_custom_call.1} parent=5 // pred_check
        _
      $region10: #{tpu_custom_call.1} parent=5 // pred_check_branch
        %408 = sbr.rel (%p405) target = $region12
      $region11: #{tpu_custom_call.1} parent=5 // pred_region
        %s409 = ssub.s32 %s30, 1
        // Predicated region
        $region13: #{tpu_custom_call.1} parent=11 // pred_check
          %p410 = pneg %p119
        $region14: #{tpu_custom_call.1} parent=11 // pred_check_branch
          %412 = sbr.rel (%p410) target = $region16
        $region15: #{tpu_custom_call.1} parent=11 // pred_region
          _
        $region16: #{tpu_custom_call.1} parent=11 // pred_fallthru
          _
        // Predicated region
        $region17: #{tpu_custom_call.1} parent=11 // pred_check
          %p413 = pneg %p140
        $region18: #{tpu_custom_call.1} parent=11 // pred_check_branch
          %415 = sbr.rel (%p413) target = $region20
        $region19: #{tpu_custom_call.1} parent=11 // pred_region
          _
        $region20: #{tpu_custom_call.1} parent=11 // pred_fallthru
          _
        // Predicated region
        $region21: #{tpu_custom_call.1} parent=11 // pred_check
          %p416 = pneg %p161
        $region22: #{tpu_custom_call.1} parent=11 // pred_check_branch
          %418 = sbr.rel (%p416) target = $region24
        $region23: #{tpu_custom_call.1} parent=11 // pred_region
          _
        $region24: #{tpu_custom_call.1} parent=11 // pred_fallthru
          _
        // Predicated region
        $region25: #{tpu_custom_call.1} parent=11 // pred_check
          %p419 = pneg %p182
        $region26: #{tpu_custom_call.1} parent=11 // pred_check_branch
          %421 = sbr.rel (%p419) target = $region28
        $region27: #{tpu_custom_call.1} parent=11 // pred_region
          _
        $region28: #{tpu_custom_call.1} parent=11 // pred_fallthru
          _
        // Predicated region
        $region29: #{tpu_custom_call.1} parent=11 // pred_check
          %p422 = pneg %p203
        $region30: #{tpu_custom_call.1} parent=11 // pred_check_branch
          %424 = sbr.rel (%p422) target = $region32
        $region31: #{tpu_custom_call.1} parent=11 // pred_region
          _
        $region32: #{tpu_custom_call.1} parent=11 // pred_fallthru
          _
        // Predicated region
        $region33: #{tpu_custom_call.1} parent=11 // pred_check
          %p425 = pneg %p224
        $region34: #{tpu_custom_call.1} parent=11 // pred_check_branch
          %427 = sbr.rel (%p425) target = $region36
        $region35: #{tpu_custom_call.1} parent=11 // pred_region
          _
        $region36: #{tpu_custom_call.1} parent=11 // pred_fallthru
          _
        // Predicated region
        $region37: #{tpu_custom_call.1} parent=11 // pred_check
          %p428 = pneg %p245
        $region38: #{tpu_custom_call.1} parent=11 // pred_check_branch
          %430 = sbr.rel (%p428) target = $region40
        $region39: #{tpu_custom_call.1} parent=11 // pred_region
          _
        $region40: #{tpu_custom_call.1} parent=11 // pred_fallthru
          _
        // Predicated region
        $region41: #{tpu_custom_call.1} parent=11 // pred_check
          %p431 = pneg %p266
        $region42: #{tpu_custom_call.1} parent=11 // pred_check_branch
          %433 = sbr.rel (%p431) target = $region44
        $region43: #{tpu_custom_call.1} parent=11 // pred_region
          _
        $region44: #{tpu_custom_call.1} parent=11 // pred_fallthru
          _
        // Predicated region
        $region45: #{tpu_custom_call.1} parent=11 // pred_check
          %p434 = pneg %p287
        $region46: #{tpu_custom_call.1} parent=11 // pred_check_branch
          %436 = sbr.rel (%p434) target = $region48
        $region47: #{tpu_custom_call.1} parent=11 // pred_region
          _
        $region48: #{tpu_custom_call.1} parent=11 // pred_fallthru
          _
      $region12: #{tpu_custom_call.1} parent=5 // pred_fallthru
        _
      %p437 = scmp.lt.s32.totalorder %s30, 2
      // Predicated region
      $region49: #{tpu_custom_call.1} parent=5 // pred_check
        %p438 = pneg %p437
      $region50: #{tpu_custom_call.1} parent=5 // pred_check_branch
        %440 = sbr.rel (%p438) target = $region52
      $region51: #{tpu_custom_call.1} parent=5 // pred_region
        // Predicated region
        $region53: #{tpu_custom_call.1} parent=51 // pred_check
          %p441 = pneg %p64
        $region54: #{tpu_custom_call.1} parent=51 // pred_check_branch
          %443 = sbr.rel (%p441) target = $region56
        $region55: #{tpu_custom_call.1} parent=51 // pred_region
          %p444 = scmp.lt.s32.totalorder %s37, 1
          %s445 = scalar_select %p444, %s37, 1
          %p446 = scmp.lt.s32.totalorder %s38, 0
          %s447 = scalar_select %p446, %s38, 0
          %s448 = smul.addr %s445, 2
          %s449 = sadd.s32 %s447, %s448
          %s450 = smul.addr %s449, 8
          %s451 = scalar_lea.vmem %s0, %s450
        $region56: #{tpu_custom_call.1} parent=51 // pred_fallthru
          _
        // Predicated region
        $region57: #{tpu_custom_call.1} parent=51 // pred_check
          %p452 = pneg %p92
        $region58: #{tpu_custom_call.1} parent=51 // pred_check_branch
          %454 = sbr.rel (%p452) target = $region60
        $region59: #{tpu_custom_call.1} parent=51 // pred_region
          %p455 = scmp.lt.s32.totalorder %s37, 1
          %s456 = scalar_select %p455, %s37, 1
          %p457 = scmp.lt.s32.totalorder %s38, 0
          %s458 = scalar_select %p457, %s38, 0
          %s459 = sadd.s32 %s458, %s456
          %s460 = smul.addr %s459, 8
          %s461 = scalar_lea.vmem %s1, %s460
        $region60: #{tpu_custom_call.1} parent=51 // pred_fallthru
          _
      $region52: #{tpu_custom_call.1} parent=5 // pred_fallthru
        _
      %p462 = scmp.le.s32.totalorder 1, %s30
      %p463 = scmp.lt.s32.totalorder %s30, 3
      %p464 = pnand %p462, %p463
      %p465 = pneg %p464
      // Predicated region
      $region61: #{tpu_custom_call.1} parent=5 // pred_check
        _
      $region62: #{tpu_custom_call.1} parent=5 // pred_check_branch
        %467 = sbr.rel (%p464) target = $region64
      $region63: #{tpu_custom_call.1} parent=5 // pred_region
        %s468 = ssub.s32 %s30, 1
        %p469 = scmp.lt.s32.totalorder %s39, 1
        %s470 = scalar_select %p469, %s39, 1
        %p471 = scmp.lt.s32.totalorder %s40, 0
        %s472 = scalar_select %p471, %s40, 0
        %s473 = smul.addr %s470, 2
        %s474 = sadd.s32 %s472, %s473
        %s475 = smul.addr %s474, 8
        %s476 = scalar_lea.vmem %s0, %s475
        %p477 = pneg %p70
        %p478 = pneg %p67
        %p479 = scmp.lt.s32.totalorder %s39, 1
        %s480 = scalar_select %p479, %s39, 1
        %p481 = scmp.lt.s32.totalorder %s40, 0
        %s482 = scalar_select %p481, %s40, 0
        %s483 = sadd.s32 %s482, %s480
        %s484 = smul.addr %s483, 8
        %s485 = scalar_lea.vmem %s1, %s484
        %p486 = pneg %p98
        %p487 = pneg %p95
        %p488 = pneg %p119
        %p489 = pneg %p116
        %p490 = pneg %p140
        %p491 = pneg %p137
        %p492 = pneg %p161
        %p493 = pneg %p158
        %p494 = pneg %p182
        %p495 = pneg %p179
        %p496 = pneg %p203
        %p497 = pneg %p200
        %p498 = pneg %p224
        %p499 = pneg %p221
        %p500 = pneg %p245
        %p501 = pneg %p242
        %p502 = pneg %p266
        %p503 = pneg %p263
        %p504 = pneg %p287
        %p505 = pneg %p284
        %p506 = pneg %p315
        %p507 = pneg %p312
        %s508 = sand.u32 %s302, 1
        %s509 = scalar_lea.sflag [#allocation5], %s508
        %s510 = sand.u32 %s302, 1
        %s511 = smul.addr %s510, 8
        %s512 = scalar_lea.vmem [#allocation4], %s511
        %p513 = pneg %p343
        %p514 = pneg %p340
        %s515 = sand.u32 %s35, 1
        %s516 = scalar_lea.sflag [#allocation7], %s515
        %s517 = sand.u32 %s330, 1
        %s518 = smul.addr %s517, 8
        %s519 = scalar_lea.vmem [#allocation6], %s518
        %p520 = pneg %p369
        %p521 = pneg %p366
        %s522 = sand.u32 %s35, 1
        %s523 = scalar_lea.sflag [#allocation7], %s522
        %s524 = sand.u32 %s356, 1
        %s525 = scalar_lea.vmem [#allocation8], %s524
        %p526 = pneg %p395
        %p527 = pneg %p392
        %s528 = sand.u32 %s382, 1
        %s529 = scalar_lea.sflag [#allocation10], %s528
        %s530 = sand.u32 %s382, 1
        %s531 = scalar_lea.vmem [#allocation9], %s530
        %p532 = scmp.lt.s32.totalorder %s39, 1
        %s533 = scalar_select %p532, %s39, 1
        %p534 = scmp.lt.s32.totalorder %s40, 0
        %s535 = scalar_select %p534, %s40, 0
        %s536 = smul.addr %s533, 2
        %s537 = sadd.s32 %s535, %s536
        %s538 = smul.addr %s537, 8
        %s539 = scalar_lea.vmem %s0, %s538
        %p540 = scmp.lt.s32.totalorder %s39, 1
        %s541 = scalar_select %p540, %s39, 1
        %p542 = scmp.lt.s32.totalorder %s40, 0
        %s543 = scalar_select %p542, %s40, 0
        %s544 = sadd.s32 %s543, %s541
        %s545 = smul.addr %s544, 8
        %s546 = scalar_lea.vmem %s1, %s545
        %p547 = scmp.eq.s32.totalorder %s40, 0
        // Predicated region
        $region65: #{tpu_custom_call.1} parent=63 // pred_check
          %p548 = pneg %p547
        $region66: #{tpu_custom_call.1} parent=63 // pred_check_branch
          %550 = sbr.rel (%p548) target = $region68
        $region67: #{tpu_custom_call.1} parent=63 // pred_region
          %551 = vst [vmem:[#allocation2] sm:$0x1] 0.0
          %552 = vst [vmem:[#allocation3] sm:$0x1] 0.0
        $region68: #{tpu_custom_call.1} parent=63 // pred_fallthru
          _
        %v553 = vld [vmem:[%s539] sm:$0xff]
        %v554 = vld [vmem:[%s539 + $0x8] sm:$0xff]
        %v555 = vld [vmem:[%s546] sm:$0xff]
        %v556 = vld [vmem:[%s2] sm:$0xff]
        %v557 = vld [vmem:[%s2 + $0x8] sm:$0xff]
        %v558 = vld [vmem:[%s3] sm:$0xff]
        %v559 = vld [vmem:[%s3 + $0x8] sm:$0xff]
        %561 = vset.pattern.permute.xlu0 0
        %562 = vperm.xlu0 %561, %v558
        %v563 = vpop.permute.xlu0 %562
        %566 = vset.pattern.permute.xlu0 0
        %567 = vperm.xlu0 %566, %v559
        %v568 = vpop.permute.xlu0 %567
        %vm570 = vcmask 130048
        %v572 = vsel %vm570, %v556, 0
        %v575 = vsel %vm570, %v557, 0
        %577 = vmatprep.subr.mxu0 0.0
        %578 = vmatpush1.msra.mxu0 %v553
        %579 = vmatprep.subr.mxu0 0.0
        %580 = vmatpush1.msra.mxu0 %v554
        %581 = vmatprep.subr.mxu0 0.0
        %582 = vmatpush1.msra.mxu0 0.0
        %583 = vmatprep.subr.mxu0 0.0
        %584 = vmatpush1.msra.mxu0 0.0
        %585 = vmatprep.subr.mxu0 0.0
        %586 = vmatpush1.msra.mxu0 0.0
        %587 = vmatprep.subr.mxu0 0.0
        %588 = vmatpush1.msra.mxu0 0.0
        %589 = vmatprep.subr.mxu0 0.0
        %590 = vmatpush1.msra.mxu0 0.0
        %591 = vmatprep.subr.mxu0 0.0
        %592 = vmatpush1.msra.mxu0 0.0
        %593 = vmatprep.subr.mxu0 0.0
        %594 = vmatpush1.msra.mxu0 0.0
        %595 = vmatprep.subr.mxu0 0.0
        %596 = vmatpush1.msra.mxu0 0.0
        %597 = vmatprep.subr.mxu0 0.0
        %598 = vmatpush1.msra.mxu0 0.0
        %599 = vmatprep.subr.mxu0 0.0
        %600 = vmatpush1.msra.mxu0 0.0
        %601 = vmatprep.subr.mxu0 0.0
        %602 = vmatpush1.msra.mxu0 0.0
        %603 = vmatprep.subr.mxu0 0.0
        %604 = vmatpush1.msra.mxu0 0.0
        %605 = vmatprep.subr.mxu0 0.0
        %606 = vmatpush1.msra.mxu0 0.0
        %607 = vmatprep.subr.mxu0 0.0
        %608 = vmatpush1.msra.mxu0 0.0
        %609 = vmatprep.subr.mxu0 0.0
        %610 = vmatpush1.msra.mxu0 0.0
        %611 = vmatprep.subr.mxu0 0.0
        %612 = vmatpush1.msra.mxu0 0.0
        %613 = vmatprep.subr.mxu0 0.0
        %614 = vmatpush1.msra.mxu0 0.0
        %615 = vmatprep.subr.mxu0 0.0
        %616 = vmatpush1.msra.mxu0 0.0
        %617 = vmatprep.subr.mxu0 0.0
        %618 = vmatpush1.msra.mxu0 0.0
        %619 = vmatprep.subr.mxu0 0.0
        %620 = vmatpush1.msra.mxu0 0.0
        %621 = vmatprep.subr.mxu0 0.0
        %622 = vmatpush1.msra.mxu0 0.0
        %623 = vmatprep.subr.mxu0 0.0
        %624 = vmatpush1.msra.mxu0 0.0
        %625 = vmatprep.subr.mxu0 0.0
        %626 = vmatpush1.msra.mxu0 0.0
        %627 = vmatprep.subr.mxu0 0.0
        %628 = vmatpush1.msra.mxu0 0.0
        %629 = vmatprep.subr.mxu0 0.0
        %630 = vmatpush1.msra.mxu0 0.0
        %631 = vmatprep.subr.mxu0 0.0
        %632 = vmatpush1.msra.mxu0 0.0
        %633 = vmatprep.subr.mxu0 0.0
        %634 = vmatpush1.msra.mxu0 0.0
        %635 = vmatprep.subr.mxu0 0.0
        %636 = vmatpush1.msra.mxu0 0.0
        %637 = vmatprep.subr.mxu0 0.0
        %638 = vmatpush1.msra.mxu0 0.0
        %639 = vmatprep.subr.mxu0 0.0
        %640 = vmatpush1.msra.mxu0 0.0
        %641 = vmatprep.mubr.f32.mxu0 0.0
        %642 = vmatmul.mubr.f32.gmra.mrb[0].mxu0 %v572
        %v643 = vpop.f32.mrb[0].mxu0
        %v644 = vadd.f32 %v563, %v643
        %v645 = vpop.f32.mrb[0].mxu0
        %646 = vmatprep.mubr.f32.mxu0 0.0
        %647 = vmatmul.mubr.f32.gmra.mrb[0].mxu0 %v575
        %v648 = vpop.f32.mrb[0].mxu0
        %v649 = vadd.f32 %v568, %v648
        %v650 = vpop.f32.mrb[0].mxu0
        %651 = vdwg.mxu0
        %s652 = scalar_lea.vmem %s2, 16
        %v653 = vld [vmem:[%s652] sm:$0xff]
        %v654 = vld [vmem:[%s652 + $0x8] sm:$0xff]
        %s655 = scalar_lea.vmem %s3, 16
        %v656 = vld [vmem:[%s655] sm:$0xff]
        %v657 = vld [vmem:[%s655 + $0x8] sm:$0xff]
        %659 = vset.pattern.permute.xlu0 0
        %660 = vperm.xlu0 %659, %v656
        %v661 = vpop.permute.xlu0 %660
        %664 = vset.pattern.permute.xlu0 0
        %665 = vperm.xlu0 %664, %v657
        %v666 = vpop.permute.xlu0 %665
        %v669 = vsel %vm570, %v653, 0
        %v672 = vsel %vm570, %v654, 0
        %674 = vmatprep.subr.mxu0 0.0
        %675 = vmatpush1.msra.mxu0 %v644
        %676 = vmatprep.subr.mxu0 0.0
        %677 = vmatpush1.msra.mxu0 %v649
        %678 = vmatprep.subr.mxu0 0.0
        %679 = vmatpush1.msra.mxu0 0.0
        %680 = vmatprep.subr.mxu0 0.0
        %681 = vmatpush1.msra.mxu0 0.0
        %682 = vmatprep.subr.mxu0 0.0
        %683 = vmatpush1.msra.mxu0 0.0
        %684 = vmatprep.subr.mxu0 0.0
        %685 = vmatpush1.msra.mxu0 0.0
        %686 = vmatprep.subr.mxu0 0.0
        %687 = vmatpush1.msra.mxu0 0.0
        %688 = vmatprep.subr.mxu0 0.0
        %689 = vmatpush1.msra.mxu0 0.0
        %690 = vmatprep.subr.mxu0 0.0
        %691 = vmatpush1.msra.mxu0 0.0
        %692 = vmatprep.subr.mxu0 0.0
        %693 = vmatpush1.msra.mxu0 0.0
        %694 = vmatprep.subr.mxu0 0.0
        %695 = vmatpush1.msra.mxu0 0.0
        %696 = vmatprep.subr.mxu0 0.0
        %697 = vmatpush1.msra.mxu0 0.0
        %698 = vmatprep.subr.mxu0 0.0
        %699 = vmatpush1.msra.mxu0 0.0
        %700 = vmatprep.subr.mxu0 0.0
        %701 = vmatpush1.msra.mxu0 0.0
        %702 = vmatprep.subr.mxu0 0.0
        %703 = vmatpush1.msra.mxu0 0.0
        %704 = vmatprep.subr.mxu0 0.0
        %705 = vmatpush1.msra.mxu0 0.0
        %706 = vmatprep.subr.mxu0 0.0
        %707 = vmatpush1.msra.mxu0 0.0
        %708 = vmatprep.subr.mxu0 0.0
        %709 = vmatpush1.msra.mxu0 0.0
        %710 = vmatprep.subr.mxu0 0.0
        %711 = vmatpush1.msra.mxu0 0.0
        %712 = vmatprep.subr.mxu0 0.0
        %713 = vmatpush1.msra.mxu0 0.0
        %714 = vmatprep.subr.mxu0 0.0
        %715 = vmatpush1.msra.mxu0 0.0
        %716 = vmatprep.subr.mxu0 0.0
        %717 = vmatpush1.msra.mxu0 0.0
        %718 = vmatprep.subr.mxu0 0.0
        %719 = vmatpush1.msra.mxu0 0.0
        %720 = vmatprep.subr.mxu0 0.0
        %721 = vmatpush1.msra.mxu0 0.0
        %722 = vmatprep.subr.mxu0 0.0
        %723 = vmatpush1.msra.mxu0 0.0
        %724 = vmatprep.subr.mxu0 0.0
        %725 = vmatpush1.msra.mxu0 0.0
        %726 = vmatprep.subr.mxu0 0.0
        %727 = vmatpush1.msra.mxu0 0.0
        %728 = vmatprep.subr.mxu0 0.0
        %729 = vmatpush1.msra.mxu0 0.0
        %730 = vmatprep.subr.mxu0 0.0
        %731 = vmatpush1.msra.mxu0 0.0
        %732 = vmatprep.subr.mxu0 0.0
        %733 = vmatpush1.msra.mxu0 0.0
        %734 = vmatprep.subr.mxu0 0.0
        %735 = vmatpush1.msra.mxu0 0.0
        %736 = vmatprep.subr.mxu0 0.0
        %737 = vmatpush1.msra.mxu0 0.0
        %738 = vmatprep.mubr.f32.mxu0 0.0
        %739 = vmatmul.mubr.f32.gmra.mrb[0].mxu0 %v669
        %v740 = vpop.f32.mrb[0].mxu0
        %v741 = vadd.f32 %v661, %v740
        %v742 = vpop.f32.mrb[0].mxu0
        %743 = vmatprep.mubr.f32.mxu0 0.0
        %744 = vmatmul.mubr.f32.gmra.mrb[0].mxu0 %v672
        %v745 = vpop.f32.mrb[0].mxu0
        %v746 = vadd.f32 %v666, %v745
        %v747 = vpop.f32.mrb[0].mxu0
        %748 = vdwg.mxu0
        %s749 = scalar_lea.vmem %s4, 32
        %v750 = vld [vmem:[%s749] sm:$0xff]
        %v751 = vld [vmem:[%s749 + $0x8] sm:$0xff]
        %v752 = vld [vmem:[%s749 + $0x10] sm:$0xff]
        %v753 = vld [vmem:[%s749 + $0x18] sm:$0xff]
        %s754 = scalar_lea.vmem %s5, 32
        %v755 = vld [vmem:[%s754] sm:$0xff]
        %v756 = vld [vmem:[%s754 + $0x8] sm:$0xff]
        %v757 = vld [vmem:[%s754 + $0x10] sm:$0xff]
        %v758 = vld [vmem:[%s754 + $0x18] sm:$0xff]
        %vm759 = vcmask 64512
        %v761 = vsel %vm759, %v755, 0
        %v764 = vsel %vm759, %v756, 0
        %v767 = vsel %vm759, %v757, 0
        %v770 = vsel %vm759, %v758, 0
        %772 = vmatprep.subr.mxu0 0.0
        %773 = vmatpush1.msra.mxu0 %v555
        %774 = vmatprep.subr.mxu0 0.0
        %775 = vmatpush1.msra.mxu0 0.0
        %776 = vmatprep.subr.mxu0 0.0
        %777 = vmatpush1.msra.mxu0 0.0
        %778 = vmatprep.subr.mxu0 0.0
        %779 = vmatpush1.msra.mxu0 0.0
        %780 = vmatprep.subr.mxu0 0.0
        %781 = vmatpush1.msra.mxu0 0.0
        %782 = vmatprep.subr.mxu0 0.0
        %783 = vmatpush1.msra.mxu0 0.0
        %784 = vmatprep.subr.mxu0 0.0
        %785 = vmatpush1.msra.mxu0 0.0
        %786 = vmatprep.subr.mxu0 0.0
        %787 = vmatpush1.msra.mxu0 0.0
        %788 = vmatprep.subr.mxu0 0.0
        %789 = vmatpush1.msra.mxu0 0.0
        %790 = vmatprep.subr.mxu0 0.0
        %791 = vmatpush1.msra.mxu0 0.0
        %792 = vmatprep.subr.mxu0 0.0
        %793 = vmatpush1.msra.mxu0 0.0
        %794 = vmatprep.subr.mxu0 0.0
        %795 = vmatpush1.msra.mxu0 0.0
        %796 = vmatprep.subr.mxu0 0.0
        %797 = vmatpush1.msra.mxu0 0.0
        %798 = vmatprep.subr.mxu0 0.0
        %799 = vmatpush1.msra.mxu0 0.0
        %800 = vmatprep.subr.mxu0 0.0
        %801 = vmatpush1.msra.mxu0 0.0
        %802 = vmatprep.subr.mxu0 0.0
        %803 = vmatpush1.msra.mxu0 0.0
        %804 = vmatprep.subr.mxu0 0.0
        %805 = vmatpush1.msra.mxu0 0.0
        %806 = vmatprep.subr.mxu0 0.0
        %807 = vmatpush1.msra.mxu0 0.0
        %808 = vmatprep.subr.mxu0 0.0
        %809 = vmatpush1.msra.mxu0 0.0
        %810 = vmatprep.subr.mxu0 0.0
        %811 = vmatpush1.msra.mxu0 0.0
        %812 = vmatprep.subr.mxu0 0.0
        %813 = vmatpush1.msra.mxu0 0.0
        %814 = vmatprep.subr.mxu0 0.0
        %815 = vmatpush1.msra.mxu0 0.0
        %816 = vmatprep.subr.mxu0 0.0
        %817 = vmatpush1.msra.mxu0 0.0
        %818 = vmatprep.subr.mxu0 0.0
        %819 = vmatpush1.msra.mxu0 0.0
        %820 = vmatprep.subr.mxu0 0.0
        %821 = vmatpush1.msra.mxu0 0.0
        %822 = vmatprep.subr.mxu0 0.0
        %823 = vmatpush1.msra.mxu0 0.0
        %824 = vmatprep.subr.mxu0 0.0
        %825 = vmatpush1.msra.mxu0 0.0
        %826 = vmatprep.subr.mxu0 0.0
        %827 = vmatpush1.msra.mxu0 0.0
        %828 = vmatprep.subr.mxu0 0.0
        %829 = vmatpush1.msra.mxu0 0.0
        %830 = vmatprep.subr.mxu0 0.0
        %831 = vmatpush1.msra.mxu0 0.0
        %832 = vmatprep.subr.mxu0 0.0
        %833 = vmatpush1.msra.mxu0 0.0
        %834 = vmatprep.subr.mxu0 0.0
        %835 = vmatpush1.msra.mxu0 0.0
        %836 = vmatprep.mubr.f32.mxu0 0.0
        %837 = vmatmul.mubr.f32.gmra.mrb[0].mxu0 %v761
        %v838 = vpop.f32.mrb[0].mxu0
        %v839 = vadd.f32 0.0, %v838
        %v840 = vpop.f32.mrb[0].mxu0
        %841 = vmatprep.mubr.f32.mxu0 0.0
        %842 = vmatmul.mubr.f32.gmra.mrb[0].mxu0 %v764
        %v843 = vpop.f32.mrb[0].mxu0
        %v844 = vadd.f32 0.0, %v843
        %v845 = vpop.f32.mrb[0].mxu0
        %846 = vmatprep.mubr.f32.mxu0 0.0
        %847 = vmatmul.mubr.f32.gmra.mrb[0].mxu0 %v767
        %v848 = vpop.f32.mrb[0].mxu0
        %v849 = vadd.f32 0.0, %v848
        %v850 = vpop.f32.mrb[0].mxu0
        %851 = vmatprep.mubr.f32.mxu0 0.0
        %852 = vmatmul.mubr.f32.gmra.mrb[0].mxu0 %v770
        %v853 = vpop.f32.mrb[0].mxu0
        %v854 = vadd.f32 0.0, %v853
        %v855 = vpop.f32.mrb[0].mxu0
        %856 = vdwg.mxu0
        %v858 = vsel %vm759, %v750, 0
        %v861 = vsel %vm759, %v751, 0
        %v864 = vsel %vm759, %v752, 0
        %v867 = vsel %vm759, %v753, 0
        %869 = vmatprep.subr.mxu0 0.0
        %870 = vmatpush1.msra.mxu0 %v741
        %871 = vmatprep.subr.mxu0 0.0
        %872 = vmatpush1.msra.mxu0 0.0
        %873 = vmatprep.subr.mxu0 0.0
        %874 = vmatpush1.msra.mxu0 0.0
        %875 = vmatprep.subr.mxu0 0.0
        %876 = vmatpush1.msra.mxu0 0.0
        %877 = vmatprep.subr.mxu0 0.0
        %878 = vmatpush1.msra.mxu0 0.0
        %879 = vmatprep.subr.mxu0 0.0
        %880 = vmatpush1.msra.mxu0 0.0
        %881 = vmatprep.subr.mxu0 0.0
        %882 = vmatpush1.msra.mxu0 0.0
        %883 = vmatprep.subr.mxu0 0.0
        %884 = vmatpush1.msra.mxu0 0.0
        %885 = vmatprep.subr.mxu0 0.0
        %886 = vmatpush1.msra.mxu0 0.0
        %887 = vmatprep.subr.mxu0 0.0
        %888 = vmatpush1.msra.mxu0 0.0
        %889 = vmatprep.subr.mxu0 0.0
        %890 = vmatpush1.msra.mxu0 0.0
        %891 = vmatprep.subr.mxu0 0.0
        %892 = vmatpush1.msra.mxu0 0.0
        %893 = vmatprep.subr.mxu0 0.0
        %894 = vmatpush1.msra.mxu0 0.0
        %895 = vmatprep.subr.mxu0 0.0
        %896 = vmatpush1.msra.mxu0 0.0
        %897 = vmatprep.subr.mxu0 0.0
        %898 = vmatpush1.msra.mxu0 0.0
        %899 = vmatprep.subr.mxu0 0.0
        %900 = vmatpush1.msra.mxu0 0.0
        %901 = vmatprep.subr.mxu0 0.0
        %902 = vmatpush1.msra.mxu0 0.0
        %903 = vmatprep.subr.mxu0 0.0
        %904 = vmatpush1.msra.mxu0 0.0
        %905 = vmatprep.subr.mxu0 0.0
        %906 = vmatpush1.msra.mxu0 0.0
        %907 = vmatprep.subr.mxu0 0.0
        %908 = vmatpush1.msra.mxu0 0.0
        %909 = vmatprep.subr.mxu0 0.0
        %910 = vmatpush1.msra.mxu0 0.0
        %911 = vmatprep.subr.mxu0 0.0
        %912 = vmatpush1.msra.mxu0 0.0
        %913 = vmatprep.subr.mxu0 0.0
        %914 = vmatpush1.msra.mxu0 0.0
        %915 = vmatprep.subr.mxu0 0.0
        %916 = vmatpush1.msra.mxu0 0.0
        %917 = vmatprep.subr.mxu0 0.0
        %918 = vmatpush1.msra.mxu0 0.0
        %919 = vmatprep.subr.mxu0 0.0
        %920 = vmatpush1.msra.mxu0 0.0
        %921 = vmatprep.subr.mxu0 0.0
        %922 = vmatpush1.msra.mxu0 0.0
        %923 = vmatprep.subr.mxu0 0.0
        %924 = vmatpush1.msra.mxu0 0.0
        %925 = vmatprep.subr.mxu0 0.0
        %926 = vmatpush1.msra.mxu0 0.0
        %927 = vmatprep.subr.mxu0 0.0
        %928 = vmatpush1.msra.mxu0 0.0
        %929 = vmatprep.subr.mxu0 0.0
        %930 = vmatpush1.msra.mxu0 0.0
        %931 = vmatprep.subr.mxu0 0.0
        %932 = vmatpush1.msra.mxu0 0.0
        %933 = vmatprep.mubr.f32.mxu0 0.0
        %934 = vmatmul.mubr.f32.gmra.mrb[0].mxu0 %v858
        %v935 = vpop.f32.mrb[0].mxu0
        %v936 = vadd.f32 %v839, %v935
        %v937 = vpop.f32.mrb[0].mxu0
        %938 = vmatprep.mubr.f32.mxu0 0.0
        %939 = vmatmul.mubr.f32.gmra.mrb[0].mxu0 %v861
        %v940 = vpop.f32.mrb[0].mxu0
        %v941 = vadd.f32 %v844, %v940
        %v942 = vpop.f32.mrb[0].mxu0
        %943 = vmatprep.mubr.f32.mxu0 0.0
        %944 = vmatmul.mubr.f32.gmra.mrb[0].mxu0 %v864
        %v945 = vpop.f32.mrb[0].mxu0
        %v946 = vadd.f32 %v849, %v945
        %v947 = vpop.f32.mrb[0].mxu0
        %948 = vmatprep.mubr.f32.mxu0 0.0
        %949 = vmatmul.mubr.f32.gmra.mrb[0].mxu0 %v867
        %v950 = vpop.f32.mrb[0].mxu0
        %v951 = vadd.f32 %v854, %v950
        %v952 = vpop.f32.mrb[0].mxu0
        %953 = vdwg.mxu0
        %s954 = scalar_lea.vmem %s6, 32
        %v955 = vld [vmem:[%s954] sm:$0xff]
        %v956 = vld [vmem:[%s954 + $0x8] sm:$0xff]
        %v957 = vld [vmem:[%s954 + $0x10] sm:$0xff]
        %v958 = vld [vmem:[%s954 + $0x18] sm:$0xff]
        %960 = vset.pattern.permute.xlu0 0
        %961 = vperm.xlu0 %960, %v955
        %v962 = vpop.permute.xlu0 %961
        %965 = vset.pattern.permute.xlu0 0
        %966 = vperm.xlu0 %965, %v956
        %v967 = vpop.permute.xlu0 %966
        %970 = vset.pattern.permute.xlu0 0
        %971 = vperm.xlu0 %970, %v957
        %v972 = vpop.permute.xlu0 %971
        %975 = vset.pattern.permute.xlu0 0
        %976 = vperm.xlu0 %975, %v958
        %v977 = vpop.permute.xlu0 %976
        %v979 = vadd.f32 %v936, %v962
        %v980 = vadd.f32 %v941, %v967
        %v981 = vadd.f32 %v946, %v972
        %v982 = vadd.f32 %v951, %v977
        %v983 = vmax.f32 %v979, 0.0
        %v984 = vmax.f32 %v980, 0.0
        %v985 = vmax.f32 %v981, 0.0
        %v986 = vmax.f32 %v982, 0.0
        %s987 = scalar_lea.vmem %s7, 16
        %v988 = vld [vmem:[%s987] sm:$0xff]
        %v989 = vld [vmem:[%s987 + $0x8] sm:$0xff]
        %s990 = scalar_lea.vmem %s8, 16
        %v991 = vld [vmem:[%s990] sm:$0xff]
        %v992 = vld [vmem:[%s990 + $0x8] sm:$0xff]
        %994 = vset.pattern.permute.xlu0 0
        %995 = vperm.xlu0 %994, %v991
        %v996 = vpop.permute.xlu0 %995
        %999 = vset.pattern.permute.xlu0 0
        %1000 = vperm.xlu0 %999, %v992
        %v1001 = vpop.permute.xlu0 %1000
        %vm1003 = vcmask 261120
        %v1005 = vsel %vm1003, %v988, 0
        %v1008 = vsel %vm1003, %v989, 0
        %1010 = vmatprep.subr.mxu0 0.0
        %1011 = vmatpush1.msra.mxu0 %v983
        %1012 = vmatprep.subr.mxu0 0.0
        %1013 = vmatpush1.msra.mxu0 %v984
        %1014 = vmatprep.subr.mxu0 0.0
        %1015 = vmatpush1.msra.mxu0 %v985
        %1016 = vmatprep.subr.mxu0 0.0
        %1017 = vmatpush1.msra.mxu0 %v986
        %1018 = vmatprep.subr.mxu0 0.0
        %1019 = vmatpush1.msra.mxu0 0.0
        %1020 = vmatprep.subr.mxu0 0.0
        %1021 = vmatpush1.msra.mxu0 0.0
        %1022 = vmatprep.subr.mxu0 0.0
        %1023 = vmatpush1.msra.mxu0 0.0
        %1024 = vmatprep.subr.mxu0 0.0
        %1025 = vmatpush1.msra.mxu0 0.0
        %1026 = vmatprep.subr.mxu0 0.0
        %1027 = vmatpush1.msra.mxu0 0.0
        %1028 = vmatprep.subr.mxu0 0.0
        %1029 = vmatpush1.msra.mxu0 0.0
        %1030 = vmatprep.subr.mxu0 0.0
        %1031 = vmatpush1.msra.mxu0 0.0
        %1032 = vmatprep.subr.mxu0 0.0
        %1033 = vmatpush1.msra.mxu0 0.0
        %1034 = vmatprep.subr.mxu0 0.0
        %1035 = vmatpush1.msra.mxu0 0.0
        %1036 = vmatprep.subr.mxu0 0.0
        %1037 = vmatpush1.msra.mxu0 0.0
        %1038 = vmatprep.subr.mxu0 0.0
        %1039 = vmatpush1.msra.mxu0 0.0
        %1040 = vmatprep.subr.mxu0 0.0
        %1041 = vmatpush1.msra.mxu0 0.0
        %1042 = vmatprep.subr.mxu0 0.0
        %1043 = vmatpush1.msra.mxu0 0.0
        %1044 = vmatprep.subr.mxu0 0.0
        %1045 = vmatpush1.msra.mxu0 0.0
        %1046 = vmatprep.subr.mxu0 0.0
        %1047 = vmatpush1.msra.mxu0 0.0
        %1048 = vmatprep.subr.mxu0 0.0
        %1049 = vmatpush1.msra.mxu0 0.0
        %1050 = vmatprep.subr.mxu0 0.0
        %1051 = vmatpush1.msra.mxu0 0.0
        %1052 = vmatprep.subr.mxu0 0.0
        %1053 = vmatpush1.msra.mxu0 0.0
        %1054 = vmatprep.subr.mxu0 0.0
        %1055 = vmatpush1.msra.mxu0 0.0
        %1056 = vmatprep.subr.mxu0 0.0
        %1057 = vmatpush1.msra.mxu0 0.0
        %1058 = vmatprep.subr.mxu0 0.0
        %1059 = vmatpush1.msra.mxu0 0.0
        %1060 = vmatprep.subr.mxu0 0.0
        %1061 = vmatpush1.msra.mxu0 0.0
        %1062 = vmatprep.subr.mxu0 0.0
        %1063 = vmatpush1.msra.mxu0 0.0
        %1064 = vmatprep.subr.mxu0 0.0
        %1065 = vmatpush1.msra.mxu0 0.0
        %1066 = vmatprep.subr.mxu0 0.0
        %1067 = vmatpush1.msra.mxu0 0.0
        %1068 = vmatprep.subr.mxu0 0.0
        %1069 = vmatpush1.msra.mxu0 0.0
        %1070 = vmatprep.subr.mxu0 0.0
        %1071 = vmatpush1.msra.mxu0 0.0
        %1072 = vmatprep.subr.mxu0 0.0
        %1073 = vmatpush1.msra.mxu0 0.0
        %1074 = vmatprep.mubr.f32.mxu0 0.0
        %1075 = vmatmul.mubr.f32.gmra.mrb[0].mxu0 %v1005
        %v1076 = vpop.f32.mrb[0].mxu0
        %v1077 = vadd.f32 %v996, %v1076
        %v1078 = vpop.f32.mrb[0].mxu0
        %1079 = vmatprep.mubr.f32.mxu0 0.0
        %1080 = vmatmul.mubr.f32.gmra.mrb[0].mxu0 %v1008
        %v1081 = vpop.f32.mrb[0].mxu0
        %v1082 = vadd.f32 %v1001, %v1081
        %v1083 = vpop.f32.mrb[0].mxu0
        %1084 = vdwg.mxu0
        %v1085 = vmin.f32 %v1082, 0.0
        %v1086 = vand.u32 2147483647, %v1082
        %v1087 = vsub.f32 0.0, %v1086
        %v1088 = vmul.f32 %v1087, 1.442695
        %v1089 = vpow.pop %v1088
        %v1090 = vadd.f32 %v1089, 1.0
        %v1091 = vlog2.pop %v1090
        %v1092 = vmul.f32 %v1091, 0.6931472
        %v1093 = vsub.f32 %v1085, %v1092
        %v1094 = vadd.f32 %v746, %v1077
        %v1095 = vmul.f32 %v1093, 1.442695
        %v1096 = vpow.pop %v1095
        %v1097 = vmul.f32 %v1094, %v1096
        %vm1098 = vcmask 523264
        %v1099 = vsel %vm1098, %v1093, 0.0
        %1100 = vadd.xlane.f32.xlu0 %v1099
        %v1101 = vpop.xlane.xlu0 %1100
        %v1102 = vrot.slane %v1101, 4
        %v1103 = vadd.f32 %v1101, %v1102
        %v1104 = vrot.slane %v1103, 2
        %v1105 = vadd.f32 %v1103, %v1104
        %v1106 = vrot.slane %v1105, 1
        %v1107 = vadd.f32 %v1105, %v1106
        %s1108 = vtos %v1107
        %s1109 = sadd.f32 %s1108, 0.0
        %s1110 = scalar_lea.vmem %s2, 32
        %v1111 = vld [vmem:[%s1110] sm:$0xff]
        %v1112 = vld [vmem:[%s1110 + $0x8] sm:$0xff]
        %s1113 = scalar_lea.vmem %s3, 32
        %v1114 = vld [vmem:[%s1113] sm:$0xff]
        %v1115 = vld [vmem:[%s1113 + $0x8] sm:$0xff]
        %1117 = vset.pattern.permute.xlu0 0
        %1118 = vperm.xlu0 %1117, %v1114
        %v1119 = vpop.permute.xlu0 %1118
        %1122 = vset.pattern.permute.xlu0 0
        %1123 = vperm.xlu0 %1122, %v1115
        %v1124 = vpop.permute.xlu0 %1123
        %v1127 = vsel %vm570, %v1111, 0
        %v1130 = vsel %vm570, %v1112, 0
        %1132 = vmatprep.subr.mxu0 0.0
        %1133 = vmatpush1.msra.mxu0 %v741
        %1134 = vmatprep.subr.mxu0 0.0
        %1135 = vmatpush1.msra.mxu0 %v1097
        %1136 = vmatprep.subr.mxu0 0.0
        %1137 = vmatpush1.msra.mxu0 0.0
        %1138 = vmatprep.subr.mxu0 0.0
        %1139 = vmatpush1.msra.mxu0 0.0
        %1140 = vmatprep.subr.mxu0 0.0
        %1141 = vmatpush1.msra.mxu0 0.0
        %1142 = vmatprep.subr.mxu0 0.0
        %1143 = vmatpush1.msra.mxu0 0.0
        %1144 = vmatprep.subr.mxu0 0.0
        %1145 = vmatpush1.msra.mxu0 0.0
        %1146 = vmatprep.subr.mxu0 0.0
        %1147 = vmatpush1.msra.mxu0 0.0
        %1148 = vmatprep.subr.mxu0 0.0
        %1149 = vmatpush1.msra.mxu0 0.0
        %1150 = vmatprep.subr.mxu0 0.0
        %1151 = vmatpush1.msra.mxu0 0.0
        %1152 = vmatprep.subr.mxu0 0.0
        %1153 = vmatpush1.msra.mxu0 0.0
        %1154 = vmatprep.subr.mxu0 0.0
        %1155 = vmatpush1.msra.mxu0 0.0
        %1156 = vmatprep.subr.mxu0 0.0
        %1157 = vmatpush1.msra.mxu0 0.0
        %1158 = vmatprep.subr.mxu0 0.0
        %1159 = vmatpush1.msra.mxu0 0.0
        %1160 = vmatprep.subr.mxu0 0.0
        %1161 = vmatpush1.msra.mxu0 0.0
        %1162 = vmatprep.subr.mxu0 0.0
        %1163 = vmatpush1.msra.mxu0 0.0
        %1164 = vmatprep.subr.mxu0 0.0
        %1165 = vmatpush1.msra.mxu0 0.0
        %1166 = vmatprep.subr.mxu0 0.0
        %1167 = vmatpush1.msra.mxu0 0.0
        %1168 = vmatprep.subr.mxu0 0.0
        %1169 = vmatpush1.msra.mxu0 0.0
        %1170 = vmatprep.subr.mxu0 0.0
        %1171 = vmatpush1.msra.mxu0 0.0
        %1172 = vmatprep.subr.mxu0 0.0
        %1173 = vmatpush1.msra.mxu0 0.0
        %1174 = vmatprep.subr.mxu0 0.0
        %1175 = vmatpush1.msra.mxu0 0.0
        %1176 = vmatprep.subr.mxu0 0.0
        %1177 = vmatpush1.msra.mxu0 0.0
        %1178 = vmatprep.subr.mxu0 0.0
        %1179 = vmatpush1.msra.mxu0 0.0
        %1180 = vmatprep.subr.mxu0 0.0
        %1181 = vmatpush1.msra.mxu0 0.0
        %1182 = vmatprep.subr.mxu0 0.0
        %1183 = vmatpush1.msra.mxu0 0.0
        %1184 = vmatprep.subr.mxu0 0.0
        %1185 = vmatpush1.msra.mxu0 0.0
        %1186 = vmatprep.subr.mxu0 0.0
        %1187 = vmatpush1.msra.mxu0 0.0
        %1188 = vmatprep.subr.mxu0 0.0
        %1189 = vmatpush1.msra.mxu0 0.0
        %1190 = vmatprep.subr.mxu0 0.0
        %1191 = vmatpush1.msra.mxu0 0.0
        %1192 = vmatprep.subr.mxu0 0.0
        %1193 = vmatpush1.msra.mxu0 0.0
        %1194 = vmatprep.subr.mxu0 0.0
        %1195 = vmatpush1.msra.mxu0 0.0
        %1196 = vmatprep.mubr.f32.mxu0 0.0
        %1197 = vmatmul.mubr.f32.gmra.mrb[0].mxu0 %v1127
        %v1198 = vpop.f32.mrb[0].mxu0
        %v1199 = vadd.f32 %v1119, %v1198
        %v1200 = vpop.f32.mrb[0].mxu0
        %1201 = vmatprep.mubr.f32.mxu0 0.0
        %1202 = vmatmul.mubr.f32.gmra.mrb[0].mxu0 %v1130
        %v1203 = vpop.f32.mrb[0].mxu0
        %v1204 = vadd.f32 %v1124, %v1203
        %v1205 = vpop.f32.mrb[0].mxu0
        %1206 = vdwg.mxu0
        %s1207 = scalar_lea.vmem %s4, 64
        %v1208 = vld [vmem:[%s1207] sm:$0xff]
        %v1209 = vld [vmem:[%s1207 + $0x8] sm:$0xff]
        %v1210 = vld [vmem:[%s1207 + $0x10] sm:$0xff]
        %v1211 = vld [vmem:[%s1207 + $0x18] sm:$0xff]
        %s1212 = scalar_lea.vmem %s5, 64
        %v1213 = vld [vmem:[%s1212] sm:$0xff]
        %v1214 = vld [vmem:[%s1212 + $0x8] sm:$0xff]
        %v1215 = vld [vmem:[%s1212 + $0x10] sm:$0xff]
        %v1216 = vld [vmem:[%s1212 + $0x18] sm:$0xff]
        %v1218 = vsel %vm759, %v1213, 0
        %v1221 = vsel %vm759, %v1214, 0
        %v1224 = vsel %vm759, %v1215, 0
        %v1227 = vsel %vm759, %v1216, 0
        %1229 = vmatprep.subr.mxu0 0.0
        %1230 = vmatpush1.msra.mxu0 %v555
        %1231 = vmatprep.subr.mxu0 0.0
        %1232 = vmatpush1.msra.mxu0 0.0
        %1233 = vmatprep.subr.mxu0 0.0
        %1234 = vmatpush1.msra.mxu0 0.0
        %1235 = vmatprep.subr.mxu0 0.0
        %1236 = vmatpush1.msra.mxu0 0.0
        %1237 = vmatprep.subr.mxu0 0.0
        %1238 = vmatpush1.msra.mxu0 0.0
        %1239 = vmatprep.subr.mxu0 0.0
        %1240 = vmatpush1.msra.mxu0 0.0
        %1241 = vmatprep.subr.mxu0 0.0
        %1242 = vmatpush1.msra.mxu0 0.0
        %1243 = vmatprep.subr.mxu0 0.0
        %1244 = vmatpush1.msra.mxu0 0.0
        %1245 = vmatprep.subr.mxu0 0.0
        %1246 = vmatpush1.msra.mxu0 0.0
        %1247 = vmatprep.subr.mxu0 0.0
        %1248 = vmatpush1.msra.mxu0 0.0
        %1249 = vmatprep.subr.mxu0 0.0
        %1250 = vmatpush1.msra.mxu0 0.0
        %1251 = vmatprep.subr.mxu0 0.0
        %1252 = vmatpush1.msra.mxu0 0.0
        %1253 = vmatprep.subr.mxu0 0.0
        %1254 = vmatpush1.msra.mxu0 0.0
        %1255 = vmatprep.subr.mxu0 0.0
        %1256 = vmatpush1.msra.mxu0 0.0
        %1257 = vmatprep.subr.mxu0 0.0
        %1258 = vmatpush1.msra.mxu0 0.0
        %1259 = vmatprep.subr.mxu0 0.0
        %1260 = vmatpush1.msra.mxu0 0.0
        %1261 = vmatprep.subr.mxu0 0.0
        %1262 = vmatpush1.msra.mxu0 0.0
        %1263 = vmatprep.subr.mxu0 0.0
        %1264 = vmatpush1.msra.mxu0 0.0
        %1265 = vmatprep.subr.mxu0 0.0
        %1266 = vmatpush1.msra.mxu0 0.0
        %1267 = vmatprep.subr.mxu0 0.0
        %1268 = vmatpush1.msra.mxu0 0.0
        %1269 = vmatprep.subr.mxu0 0.0
        %1270 = vmatpush1.msra.mxu0 0.0
        %1271 = vmatprep.subr.mxu0 0.0
        %1272 = vmatpush1.msra.mxu0 0.0
        %1273 = vmatprep.subr.mxu0 0.0
        %1274 = vmatpush1.msra.mxu0 0.0
        %1275 = vmatprep.subr.mxu0 0.0
        %1276 = vmatpush1.msra.mxu0 0.0
        %1277 = vmatprep.subr.mxu0 0.0
        %1278 = vmatpush1.msra.mxu0 0.0
        %1279 = vmatprep.subr.mxu0 0.0
        %1280 = vmatpush1.msra.mxu0 0.0
        %1281 = vmatprep.subr.mxu0 0.0
        %1282 = vmatpush1.msra.mxu0 0.0
        %1283 = vmatprep.subr.mxu0 0.0
        %1284 = vmatpush1.msra.mxu0 0.0
        %1285 = vmatprep.subr.mxu0 0.0
        %1286 = vmatpush1.msra.mxu0 0.0
        %1287 = vmatprep.subr.mxu0 0.0
        %1288 = vmatpush1.msra.mxu0 0.0
        %1289 = vmatprep.subr.mxu0 0.0
        %1290 = vmatpush1.msra.mxu0 0.0
        %1291 = vmatprep.subr.mxu0 0.0
        %1292 = vmatpush1.msra.mxu0 0.0
        %1293 = vmatprep.mubr.f32.mxu0 0.0
        %1294 = vmatmul.mubr.f32.gmra.mrb[0].mxu0 %v1218
        %v1295 = vpop.f32.mrb[0].mxu0
        %v1296 = vadd.f32 0.0, %v1295
        %v1297 = vpop.f32.mrb[0].mxu0
        %1298 = vmatprep.mubr.f32.mxu0 0.0
        %1299 = vmatmul.mubr.f32.gmra.mrb[0].mxu0 %v1221
        %v1300 = vpop.f32.mrb[0].mxu0
        %v1301 = vadd.f32 0.0, %v1300
        %v1302 = vpop.f32.mrb[0].mxu0
        %1303 = vmatprep.mubr.f32.mxu0 0.0
        %1304 = vmatmul.mubr.f32.gmra.mrb[0].mxu0 %v1224
        %v1305 = vpop.f32.mrb[0].mxu0
        %v1306 = vadd.f32 0.0, %v1305
        %v1307 = vpop.f32.mrb[0].mxu0
        %1308 = vmatprep.mubr.f32.mxu0 0.0
        %1309 = vmatmul.mubr.f32.gmra.mrb[0].mxu0 %v1227
        %v1310 = vpop.f32.mrb[0].mxu0
        %v1311 = vadd.f32 0.0, %v1310
        %v1312 = vpop.f32.mrb[0].mxu0
        %1313 = vdwg.mxu0
        %v1315 = vsel %vm759, %v1208, 0
        %v1318 = vsel %vm759, %v1209, 0
        %v1321 = vsel %vm759, %v1210, 0
        %v1324 = vsel %vm759, %v1211, 0
        %1326 = vmatprep.subr.mxu0 0.0
        %1327 = vmatpush1.msra.mxu0 %v1199
        %1328 = vmatprep.subr.mxu0 0.0
        %1329 = vmatpush1.msra.mxu0 0.0
        %1330 = vmatprep.subr.mxu0 0.0
        %1331 = vmatpush1.msra.mxu0 0.0
        %1332 = vmatprep.subr.mxu0 0.0
        %1333 = vmatpush1.msra.mxu0 0.0
        %1334 = vmatprep.subr.mxu0 0.0
        %1335 = vmatpush1.msra.mxu0 0.0
        %1336 = vmatprep.subr.mxu0 0.0
        %1337 = vmatpush1.msra.mxu0 0.0
        %1338 = vmatprep.subr.mxu0 0.0
        %1339 = vmatpush1.msra.mxu0 0.0
        %1340 = vmatprep.subr.mxu0 0.0
        %1341 = vmatpush1.msra.mxu0 0.0
        %1342 = vmatprep.subr.mxu0 0.0
        %1343 = vmatpush1.msra.mxu0 0.0
        %1344 = vmatprep.subr.mxu0 0.0
        %1345 = vmatpush1.msra.mxu0 0.0
        %1346 = vmatprep.subr.mxu0 0.0
        %1347 = vmatpush1.msra.mxu0 0.0
        %1348 = vmatprep.subr.mxu0 0.0
        %1349 = vmatpush1.msra.mxu0 0.0
        %1350 = vmatprep.subr.mxu0 0.0
        %1351 = vmatpush1.msra.mxu0 0.0
        %1352 = vmatprep.subr.mxu0 0.0
        %1353 = vmatpush1.msra.mxu0 0.0
        %1354 = vmatprep.subr.mxu0 0.0
        %1355 = vmatpush1.msra.mxu0 0.0
        %1356 = vmatprep.subr.mxu0 0.0
        %1357 = vmatpush1.msra.mxu0 0.0
        %1358 = vmatprep.subr.mxu0 0.0
        %1359 = vmatpush1.msra.mxu0 0.0
        %1360 = vmatprep.subr.mxu0 0.0
        %1361 = vmatpush1.msra.mxu0 0.0
        %1362 = vmatprep.subr.mxu0 0.0
        %1363 = vmatpush1.msra.mxu0 0.0
        %1364 = vmatprep.subr.mxu0 0.0
        %1365 = vmatpush1.msra.mxu0 0.0
        %1366 = vmatprep.subr.mxu0 0.0
        %1367 = vmatpush1.msra.mxu0 0.0
        %1368 = vmatprep.subr.mxu0 0.0
        %1369 = vmatpush1.msra.mxu0 0.0
        %1370 = vmatprep.subr.mxu0 0.0
        %1371 = vmatpush1.msra.mxu0 0.0
        %1372 = vmatprep.subr.mxu0 0.0
        %1373 = vmatpush1.msra.mxu0 0.0
        %1374 = vmatprep.subr.mxu0 0.0
        %1375 = vmatpush1.msra.mxu0 0.0
        %1376 = vmatprep.subr.mxu0 0.0
        %1377 = vmatpush1.msra.mxu0 0.0
        %1378 = vmatprep.subr.mxu0 0.0
        %1379 = vmatpush1.msra.mxu0 0.0
        %1380 = vmatprep.subr.mxu0 0.0
        %1381 = vmatpush1.msra.mxu0 0.0
        %1382 = vmatprep.subr.mxu0 0.0
        %1383 = vmatpush1.msra.mxu0 0.0
        %1384 = vmatprep.subr.mxu0 0.0
        %1385 = vmatpush1.msra.mxu0 0.0
        %1386 = vmatprep.subr.mxu0 0.0
        %1387 = vmatpush1.msra.mxu0 0.0
        %1388 = vmatprep.subr.mxu0 0.0
        %1389 = vmatpush1.msra.mxu0 0.0
        %1390 = vmatprep.mubr.f32.mxu0 0.0
        %1391 = vmatmul.mubr.f32.gmra.mrb[0].mxu0 %v1315
        %v1392 = vpop.f32.mrb[0].mxu0
        %v1393 = vadd.f32 %v1296, %v1392
        %v1394 = vpop.f32.mrb[0].mxu0
        %1395 = vmatprep.mubr.f32.mxu0 0.0
        %1396 = vmatmul.mubr.f32.gmra.mrb[0].mxu0 %v1318
        %v1397 = vpop.f32.mrb[0].mxu0
        %v1398 = vadd.f32 %v1301, %v1397
        %v1399 = vpop.f32.mrb[0].mxu0
        %1400 = vmatprep.mubr.f32.mxu0 0.0
        %1401 = vmatmul.mubr.f32.gmra.mrb[0].mxu0 %v1321
        %v1402 = vpop.f32.mrb[0].mxu0
        %v1403 = vadd.f32 %v1306, %v1402
        %v1404 = vpop.f32.mrb[0].mxu0
        %1405 = vmatprep.mubr.f32.mxu0 0.0
        %1406 = vmatmul.mubr.f32.gmra.mrb[0].mxu0 %v1324
        %v1407 = vpop.f32.mrb[0].mxu0
        %v1408 = vadd.f32 %v1311, %v1407
        %v1409 = vpop.f32.mrb[0].mxu0
        %1410 = vdwg.mxu0
        %s1411 = scalar_lea.vmem %s6, 64
        %v1412 = vld [vmem:[%s1411] sm:$0xff]
        %v1413 = vld [vmem:[%s1411 + $0x8] sm:$0xff]
        %v1414 = vld [vmem:[%s1411 + $0x10] sm:$0xff]
        %v1415 = vld [vmem:[%s1411 + $0x18] sm:$0xff]
        %1417 = vset.pattern.permute.xlu0 0
        %1418 = vperm.xlu0 %1417, %v1412
        %v1419 = vpop.permute.xlu0 %1418
        %1422 = vset.pattern.permute.xlu0 0
        %1423 = vperm.xlu0 %1422, %v1413
        %v1424 = vpop.permute.xlu0 %1423
        %1427 = vset.pattern.permute.xlu0 0
        %1428 = vperm.xlu0 %1427, %v1414
        %v1429 = vpop.permute.xlu0 %1428
        %1432 = vset.pattern.permute.xlu0 0
        %1433 = vperm.xlu0 %1432, %v1415
        %v1434 = vpop.permute.xlu0 %1433
        %v1436 = vadd.f32 %v1393, %v1419
        %v1437 = vadd.f32 %v1398, %v1424
        %v1438 = vadd.f32 %v1403, %v1429
        %v1439 = vadd.f32 %v1408, %v1434
        %v1440 = vmax.f32 %v1436, 0.0
        %v1441 = vmax.f32 %v1437, 0.0
        %v1442 = vmax.f32 %v1438, 0.0
        %v1443 = vmax.f32 %v1439, 0.0
        %s1444 = scalar_lea.vmem %s7, 32
        %v1445 = vld [vmem:[%s1444] sm:$0xff]
        %v1446 = vld [vmem:[%s1444 + $0x8] sm:$0xff]
        %s1447 = scalar_lea.vmem %s8, 32
        %v1448 = vld [vmem:[%s1447] sm:$0xff]
        %v1449 = vld [vmem:[%s1447 + $0x8] sm:$0xff]
        %1451 = vset.pattern.permute.xlu0 0
        %1452 = vperm.xlu0 %1451, %v1448
        %v1453 = vpop.permute.xlu0 %1452
        %1456 = vset.pattern.permute.xlu0 0
        %1457 = vperm.xlu0 %1456, %v1449
        %v1458 = vpop.permute.xlu0 %1457
        %v1461 = vsel %vm1003, %v1445, 0
        %v1464 = vsel %vm1003, %v1446, 0
        %1466 = vmatprep.subr.mxu0 0.0
        %1467 = vmatpush1.msra.mxu0 %v1440
        %1468 = vmatprep.subr.mxu0 0.0
        %1469 = vmatpush1.msra.mxu0 %v1441
        %1470 = vmatprep.subr.mxu0 0.0
        %1471 = vmatpush1.msra.mxu0 %v1442
        %1472 = vmatprep.subr.mxu0 0.0
        %1473 = vmatpush1.msra.mxu0 %v1443
        %1474 = vmatprep.subr.mxu0 0.0
        %1475 = vmatpush1.msra.mxu0 0.0
        %1476 = vmatprep.subr.mxu0 0.0
        %1477 = vmatpush1.msra.mxu0 0.0
        %1478 = vmatprep.subr.mxu0 0.0
        %1479 = vmatpush1.msra.mxu0 0.0
        %1480 = vmatprep.subr.mxu0 0.0
        %1481 = vmatpush1.msra.mxu0 0.0
        %1482 = vmatprep.subr.mxu0 0.0
        %1483 = vmatpush1.msra.mxu0 0.0
        %1484 = vmatprep.subr.mxu0 0.0
        %1485 = vmatpush1.msra.mxu0 0.0
        %1486 = vmatprep.subr.mxu0 0.0
        %1487 = vmatpush1.msra.mxu0 0.0
        %1488 = vmatprep.subr.mxu0 0.0
        %1489 = vmatpush1.msra.mxu0 0.0
        %1490 = vmatprep.subr.mxu0 0.0
        %1491 = vmatpush1.msra.mxu0 0.0
        %1492 = vmatprep.subr.mxu0 0.0
        %1493 = vmatpush1.msra.mxu0 0.0
        %1494 = vmatprep.subr.mxu0 0.0
        %1495 = vmatpush1.msra.mxu0 0.0
        %1496 = vmatprep.subr.mxu0 0.0
        %1497 = vmatpush1.msra.mxu0 0.0
        %1498 = vmatprep.subr.mxu0 0.0
        %1499 = vmatpush1.msra.mxu0 0.0
        %1500 = vmatprep.subr.mxu0 0.0
        %1501 = vmatpush1.msra.mxu0 0.0
        %1502 = vmatprep.subr.mxu0 0.0
        %1503 = vmatpush1.msra.mxu0 0.0
        %1504 = vmatprep.subr.mxu0 0.0
        %1505 = vmatpush1.msra.mxu0 0.0
        %1506 = vmatprep.subr.mxu0 0.0
        %1507 = vmatpush1.msra.mxu0 0.0
        %1508 = vmatprep.subr.mxu0 0.0
        %1509 = vmatpush1.msra.mxu0 0.0
        %1510 = vmatprep.subr.mxu0 0.0
        %1511 = vmatpush1.msra.mxu0 0.0
        %1512 = vmatprep.subr.mxu0 0.0
        %1513 = vmatpush1.msra.mxu0 0.0
        %1514 = vmatprep.subr.mxu0 0.0
        %1515 = vmatpush1.msra.mxu0 0.0
        %1516 = vmatprep.subr.mxu0 0.0
        %1517 = vmatpush1.msra.mxu0 0.0
        %1518 = vmatprep.subr.mxu0 0.0
        %1519 = vmatpush1.msra.mxu0 0.0
        %1520 = vmatprep.subr.mxu0 0.0
        %1521 = vmatpush1.msra.mxu0 0.0
        %1522 = vmatprep.subr.mxu0 0.0
        %1523 = vmatpush1.msra.mxu0 0.0
        %1524 = vmatprep.subr.mxu0 0.0
        %1525 = vmatpush1.msra.mxu0 0.0
        %1526 = vmatprep.subr.mxu0 0.0
        %1527 = vmatpush1.msra.mxu0 0.0
        %1528 = vmatprep.subr.mxu0 0.0
        %1529 = vmatpush1.msra.mxu0 0.0
        %1530 = vmatprep.mubr.f32.mxu0 0.0
        %1531 = vmatmul.mubr.f32.gmra.mrb[0].mxu0 %v1461
        %v1532 = vpop.f32.mrb[0].mxu0
        %v1533 = vadd.f32 %v1453, %v1532
        %v1534 = vpop.f32.mrb[0].mxu0
        %1535 = vmatprep.mubr.f32.mxu0 0.0
        %1536 = vmatmul.mubr.f32.gmra.mrb[0].mxu0 %v1464
        %v1537 = vpop.f32.mrb[0].mxu0
        %v1538 = vadd.f32 %v1458, %v1537
        %v1539 = vpop.f32.mrb[0].mxu0
        %1540 = vdwg.mxu0
        %v1541 = vmin.f32 %v1538, 0.0
        %v1542 = vand.u32 2147483647, %v1538
        %v1543 = vsub.f32 0.0, %v1542
        %v1544 = vmul.f32 %v1543, 1.442695
        %v1545 = vpow.pop %v1544
        %v1546 = vadd.f32 %v1545, 1.0
        %v1547 = vlog2.pop %v1546
        %v1548 = vmul.f32 %v1547, 0.6931472
        %v1549 = vsub.f32 %v1541, %v1548
        %v1550 = vadd.f32 %v1204, %v1533
        %v1551 = vmul.f32 %v1549, 1.442695
        %v1552 = vpow.pop %v1551
        %v1553 = vmul.f32 %v1550, %v1552
        %v1554 = vsel %vm1098, %v1549, 0.0
        %1555 = vadd.xlane.f32.xlu0 %v1554
        %v1556 = vpop.xlane.xlu0 %1555
        %v1557 = vrot.slane %v1556, 4
        %v1558 = vadd.f32 %v1556, %v1557
        %v1559 = vrot.slane %v1558, 2
        %v1560 = vadd.f32 %v1558, %v1559
        %v1561 = vrot.slane %v1560, 1
        %v1562 = vadd.f32 %v1560, %v1561
        %s1563 = vtos %v1562
        %s1564 = sadd.f32 %s1109, %s1563
        %v1565 = vld [vmem:[%s9] sm:$0xff]
        %v1566 = vld [vmem:[%s9 + $0x8] sm:$0xff]
        %v1567 = vld [vmem:[%s10] sm:$0xff]
        %v1568 = vld [vmem:[%s10 + $0x8] sm:$0xff]
        %1570 = vset.pattern.permute.xlu0 0
        %1571 = vperm.xlu0 %1570, %v1567
        %v1572 = vpop.permute.xlu0 %1571
        %1575 = vset.pattern.permute.xlu0 0
        %1576 = vperm.xlu0 %1575, %v1568
        %v1577 = vpop.permute.xlu0 %1576
        %v1580 = vsel %vm759, %v1565, 0
        %v1583 = vsel %vm759, %v1566, 0
        %1585 = vmatprep.subr.mxu0 0.0
        %1586 = vmatpush1.msra.mxu0 %v1199
        %1587 = vmatprep.subr.mxu0 0.0
        %1588 = vmatpush1.msra.mxu0 0.0
        %1589 = vmatprep.subr.mxu0 0.0
        %1590 = vmatpush1.msra.mxu0 0.0
        %1591 = vmatprep.subr.mxu0 0.0
        %1592 = vmatpush1.msra.mxu0 0.0
        %1593 = vmatprep.subr.mxu0 0.0
        %1594 = vmatpush1.msra.mxu0 0.0
        %1595 = vmatprep.subr.mxu0 0.0
        %1596 = vmatpush1.msra.mxu0 0.0
        %1597 = vmatprep.subr.mxu0 0.0
        %1598 = vmatpush1.msra.mxu0 0.0
        %1599 = vmatprep.subr.mxu0 0.0
        %1600 = vmatpush1.msra.mxu0 0.0
        %1601 = vmatprep.subr.mxu0 0.0
        %1602 = vmatpush1.msra.mxu0 0.0
        %1603 = vmatprep.subr.mxu0 0.0
        %1604 = vmatpush1.msra.mxu0 0.0
        %1605 = vmatprep.subr.mxu0 0.0
        %1606 = vmatpush1.msra.mxu0 0.0
        %1607 = vmatprep.subr.mxu0 0.0
        %1608 = vmatpush1.msra.mxu0 0.0
        %1609 = vmatprep.subr.mxu0 0.0
        %1610 = vmatpush1.msra.mxu0 0.0
        %1611 = vmatprep.subr.mxu0 0.0
        %1612 = vmatpush1.msra.mxu0 0.0
        %1613 = vmatprep.subr.mxu0 0.0
        %1614 = vmatpush1.msra.mxu0 0.0
        %1615 = vmatprep.subr.mxu0 0.0
        %1616 = vmatpush1.msra.mxu0 0.0
        %1617 = vmatprep.subr.mxu0 0.0
        %1618 = vmatpush1.msra.mxu0 0.0
        %1619 = vmatprep.subr.mxu0 0.0
        %1620 = vmatpush1.msra.mxu0 0.0
        %1621 = vmatprep.subr.mxu0 0.0
        %1622 = vmatpush1.msra.mxu0 0.0
        %1623 = vmatprep.subr.mxu0 0.0
        %1624 = vmatpush1.msra.mxu0 0.0
        %1625 = vmatprep.subr.mxu0 0.0
        %1626 = vmatpush1.msra.mxu0 0.0
        %1627 = vmatprep.subr.mxu0 0.0
        %1628 = vmatpush1.msra.mxu0 0.0
        %1629 = vmatprep.subr.mxu0 0.0
        %1630 = vmatpush1.msra.mxu0 0.0
        %1631 = vmatprep.subr.mxu0 0.0
        %1632 = vmatpush1.msra.mxu0 0.0
        %1633 = vmatprep.subr.mxu0 0.0
        %1634 = vmatpush1.msra.mxu0 0.0
        %1635 = vmatprep.subr.mxu0 0.0
        %1636 = vmatpush1.msra.mxu0 0.0
        %1637 = vmatprep.subr.mxu0 0.0
        %1638 = vmatpush1.msra.mxu0 0.0
        %1639 = vmatprep.subr.mxu0 0.0
        %1640 = vmatpush1.msra.mxu0 0.0
        %1641 = vmatprep.subr.mxu0 0.0
        %1642 = vmatpush1.msra.mxu0 0.0
        %1643 = vmatprep.subr.mxu0 0.0
        %1644 = vmatpush1.msra.mxu0 0.0
        %1645 = vmatprep.subr.mxu0 0.0
        %1646 = vmatpush1.msra.mxu0 0.0
        %1647 = vmatprep.subr.mxu0 0.0
        %1648 = vmatpush1.msra.mxu0 0.0
        %1649 = vmatprep.mubr.f32.mxu0 0.0
        %1650 = vmatmul.mubr.f32.gmra.mrb[0].mxu0 %v1580
        %v1651 = vpop.f32.mrb[0].mxu0
        %v1652 = vadd.f32 %v1572, %v1651
        %v1653 = vpop.f32.mrb[0].mxu0
        %1654 = vmatprep.mubr.f32.mxu0 0.0
        %1655 = vmatmul.mubr.f32.gmra.mrb[0].mxu0 %v1583
        %v1656 = vpop.f32.mrb[0].mxu0
        %v1657 = vadd.f32 %v1577, %v1656
        %v1658 = vpop.f32.mrb[0].mxu0
        %1659 = vdwg.mxu0
        %v1660 = vsub.f32 %v1553, %v1652
        %v1661 = vmul.f32 %v1660, %v1660
        %v1662 = vmul.f32 %v1661, 0.5
        %v1663 = vmul.f32 %v1657, -2.0
        %v1664 = vmul.f32 %v1663, 1.442695
        %v1665 = vpow.pop %v1664
        %v1666 = vmul.f32 %v1662, %v1665
        %v1667 = vadd.f32 %v1657, %v1666
        %v1668 = vsel %vm1098, %v1667, 0.0
        %1669 = vadd.xlane.f32.xlu0 %v1668
        %v1670 = vpop.xlane.xlu0 %1669
        %v1671 = vrot.slane %v1670, 4
        %v1672 = vadd.f32 %v1670, %v1671
        %v1673 = vrot.slane %v1672, 2
        %v1674 = vadd.f32 %v1672, %v1673
        %v1675 = vrot.slane %v1674, 1
        %v1676 = vadd.f32 %v1674, %v1675
        %s1677 = vtos %v1676
        %s1678 = ssub.f32 0.0, %s1677
        %1679 = vst.msk [vmem:[%s512] sm:$0xff] %vm1098, %v1199
        %1680 = vst.msk [vmem:[%s519] sm:$0xff] %vm1098, %v1553
        %v1681 = vld [vmem:[#allocation2] sm:$0x1]
        %v1682 = vstv %s1564
        %v1683 = vadd.f32 %v1681, %v1682
        %1684 = vst [vmem:[#allocation2] sm:$0x1] %v1683
        %v1685 = vld [vmem:[#allocation3] sm:$0x1]
        %v1686 = vstv %s1678
        %v1687 = vadd.f32 %v1685, %v1686
        %1688 = vst [vmem:[#allocation3] sm:$0x1] %v1687
        // Predicated region
        $region69: #{tpu_custom_call.1} parent=63 // pred_check
          %p1689 = pneg %p547
        $region70: #{tpu_custom_call.1} parent=63 // pred_check_branch
          %1691 = sbr.rel (%p1689) target = $region72
        $region71: #{tpu_custom_call.1} parent=63 // pred_region
          %v1692 = vld [vmem:[#allocation2] sm:$0x1]
          %1693 = vst [vmem:[%s525] sm:$0x1] %v1692
          %v1694 = vld [vmem:[#allocation3] sm:$0x1]
          %1695 = vst [vmem:[%s531] sm:$0x1] %v1694
        $region72: #{tpu_custom_call.1} parent=63 // pred_fallthru
          _
        %s1696 = sand.u32 %s302, 1
        %s1697 = scalar_lea.sflag [#allocation5], %s1696
        %s1698 = sand.u32 %s302, 1
        %s1699 = smul.addr %s1698, 8
        %s1700 = scalar_lea.vmem [#allocation4], %s1699
        %s1701 = sand.u32 %s35, 1
        %s1702 = scalar_lea.sflag [#allocation7], %s1701
        %s1703 = sand.u32 %s330, 1
        %s1704 = smul.addr %s1703, 8
        %s1705 = scalar_lea.vmem [#allocation6], %s1704
        %s1706 = sand.u32 %s35, 1
        %s1707 = scalar_lea.sflag [#allocation7], %s1706
        %s1708 = sand.u32 %s356, 1
        %s1709 = scalar_lea.vmem [#allocation8], %s1708
        %s1710 = sand.u32 %s382, 1
        %s1711 = scalar_lea.sflag [#allocation10], %s1710
        %s1712 = sand.u32 %s382, 1
        %s1713 = scalar_lea.vmem [#allocation9], %s1712
        // Predicated region
        $region73: #{tpu_custom_call.1} parent=63 // pred_check
          %p1714 = pneg %p312
        $region74: #{tpu_custom_call.1} parent=63 // pred_check_branch
          %1716 = sbr.rel (%p1714) target = $region76
        $region75: #{tpu_custom_call.1} parent=63 // pred_region
          %s1718 = ssub.s32 128, 128
          %1719 = vsyncadd %s1697, %s1718
          %s1720 = sadd.s32 %s40, %s39
          %s1721 = smul.addr %s1720, 128
          %s1722 = scalar_lea.hbm %s11, %s1721
          %s1724 = sshll.u32 %s1700, 4
          %s1725 = int_to_ptr.vmem [resolvable:$true] %s1724
          %1727 = dma.vmem_to_hbm [thread:$0]  %s1725, 128, %s1722, %s1697
        $region76: #{tpu_custom_call.1} parent=63 // pred_fallthru
          _
        // Predicated region
        $region77: #{tpu_custom_call.1} parent=63 // pred_check
          %p1728 = pneg %p340
        $region78: #{tpu_custom_call.1} parent=63 // pred_check_branch
          %1730 = sbr.rel (%p1728) target = $region80
        $region79: #{tpu_custom_call.1} parent=63 // pred_region
          %s1732 = ssub.s32 128, 128
          %1733 = vsyncadd %s1702, %s1732
          %s1734 = sadd.s32 %s40, %s39
          %s1735 = smul.addr %s1734, 128
          %s1736 = scalar_lea.hbm %s12, %s1735
          %s1738 = sshll.u32 %s1705, 4
          %s1739 = int_to_ptr.vmem [resolvable:$true] %s1738
          %1741 = dma.vmem_to_hbm [thread:$0]  %s1739, 128, %s1736, %s1702
        $region80: #{tpu_custom_call.1} parent=63 // pred_fallthru
          _
        // Predicated region
        $region81: #{tpu_custom_call.1} parent=63 // pred_check
          %p1742 = pneg %p366
        $region82: #{tpu_custom_call.1} parent=63 // pred_check_branch
          %1744 = sbr.rel (%p1742) target = $region84
        $region83: #{tpu_custom_call.1} parent=63 // pred_region
          %s1746 = ssub.s32 16, 16
          %1747 = vsyncadd %s1707, %s1746
          %s1748 = smul.addr %s39, 16
          %s1749 = scalar_lea.hbm %s13, %s1748
          %s1751 = sshll.u32 %s1709, 4
          %s1752 = int_to_ptr.vmem [resolvable:$true] %s1751
          %1754 = dma.vmem_to_hbm [thread:$0]  %s1752, 16, %s1749, %s1707
        $region84: #{tpu_custom_call.1} parent=63 // pred_fallthru
          _
        // Predicated region
        $region85: #{tpu_custom_call.1} parent=63 // pred_check
          %p1755 = pneg %p392
        $region86: #{tpu_custom_call.1} parent=63 // pred_check_branch
          %1757 = sbr.rel (%p1755) target = $region88
        $region87: #{tpu_custom_call.1} parent=63 // pred_region
          %s1759 = ssub.s32 16, 16
          %1760 = vsyncadd %s1711, %s1759
          %s1761 = smul.addr %s39, 16
          %s1762 = scalar_lea.hbm %s14, %s1761
          %s1764 = sshll.u32 %s1713, 4
          %s1765 = int_to_ptr.vmem [resolvable:$true] %s1764
          %1767 = dma.vmem_to_hbm [thread:$0]  %s1765, 16, %s1762, %s1711
        $region88: #{tpu_custom_call.1} parent=63 // pred_fallthru
          _
      $region64: #{tpu_custom_call.1} parent=5 // pred_fallthru
        _
      %p1768 = scmp.le.s32.totalorder 2, %s30
      // Predicated region
      $region89: #{tpu_custom_call.1} parent=5 // pred_check
        %p1769 = pneg %p1768
      $region90: #{tpu_custom_call.1} parent=5 // pred_check_branch
        %1771 = sbr.rel (%p1769) target = $region92
      $region91: #{tpu_custom_call.1} parent=5 // pred_region
        %s1772 = ssub.s32 %s30, 2
        // Predicated region
        $region93: #{tpu_custom_call.1} parent=91 // pred_check
          %p1773 = pneg %p318
        $region94: #{tpu_custom_call.1} parent=91 // pred_check_branch
          %1775 = sbr.rel (%p1773) target = $region96
        $region95: #{tpu_custom_call.1} parent=91 // pred_region
          %s1776 = sand.u32 %s303, 1
          %s1777 = scalar_lea.sflag [#allocation5], %s1776
          %s1778 = sand.u32 %s303, 1
          %s1779 = smul.addr %s1778, 8
          %s1780 = scalar_lea.vmem [#allocation4], %s1779
          %1781 = dma.done %s1777, 128
        $region96: #{tpu_custom_call.1} parent=91 // pred_fallthru
          _
        // Predicated region
        $region97: #{tpu_custom_call.1} parent=91 // pred_check
          %p1782 = pneg %p346
        $region98: #{tpu_custom_call.1} parent=91 // pred_check_branch
          %1784 = sbr.rel (%p1782) target = $region100
        $region99: #{tpu_custom_call.1} parent=91 // pred_region
          %s1785 = sand.u32 %s36, 1
          %s1786 = scalar_lea.sflag [#allocation7], %s1785
          %s1787 = sand.u32 %s331, 1
          %s1788 = smul.addr %s1787, 8
          %s1789 = scalar_lea.vmem [#allocation6], %s1788
          %1790 = dma.done %s1786, 128
        $region100: #{tpu_custom_call.1} parent=91 // pred_fallthru
          _
        // Predicated region
        $region101: #{tpu_custom_call.1} parent=91 // pred_check
          %p1791 = pneg %p372
        $region102: #{tpu_custom_call.1} parent=91 // pred_check_branch
          %1793 = sbr.rel (%p1791) target = $region104
        $region103: #{tpu_custom_call.1} parent=91 // pred_region
          %s1794 = sand.u32 %s36, 1
          %s1795 = scalar_lea.sflag [#allocation7], %s1794
          %s1796 = sand.u32 %s357, 1
          %s1797 = scalar_lea.vmem [#allocation8], %s1796
          %1798 = dma.done %s1795, 16
        $region104: #{tpu_custom_call.1} parent=91 // pred_fallthru
          _
        // Predicated region
        $region105: #{tpu_custom_call.1} parent=91 // pred_check
          %p1799 = pneg %p398
        $region106: #{tpu_custom_call.1} parent=91 // pred_check_branch
          %1801 = sbr.rel (%p1799) target = $region108
        $region107: #{tpu_custom_call.1} parent=91 // pred_region
          %s1802 = sand.u32 %s383, 1
          %s1803 = scalar_lea.sflag [#allocation10], %s1802
          %s1804 = sand.u32 %s383, 1
          %s1805 = scalar_lea.vmem [#allocation9], %s1804
          %1806 = dma.done %s1803, 16
        $region108: #{tpu_custom_call.1} parent=91 // pred_fallthru
          _
      $region92: #{tpu_custom_call.1} parent=5 // pred_fallthru
        _
    $region6: #{tpu_custom_call.1} parent=1 // loop_footer
      %s34 = sadd.s32 1, %s30
    $region7: #{tpu_custom_call.1} parent=1 // loop_footer_branch
      %29 = sbr.rel target = $region3
    $region8: #{tpu_custom_call.1} parent=1 // loop_exit
      _
    %1807 = vsyncpa [#allocation5], 1
    %s1808 = scalar_lea.sflag [#allocation5], 1
    %1809 = vsyncpa %s1808, 1
    %1810 = vsyncpa [#allocation7], 1
    %s1811 = scalar_lea.sflag [#allocation7], 1
    %1812 = vsyncpa %s1811, 1
    %1813 = vsyncpa [#allocation10], 1
    %s1814 = scalar_lea.sflag [#allocation10], 1
    %1815 = vsyncpa %s1814, 1

</llo_original>
